<compile_context>
chip_gen: v7x
topology: tpu7x:2x2x1
jax: 0.10.0
libtpu: 0.0.40
codegen_flags: <defaults>
</compile_context>

<pallas_src>
import jax
import jax.numpy as jnp
from jax.experimental import pallas as pl
from jax.experimental.pallas import tpu as pltpu


# ----------------------------------------------------------------------------- kernel

def combined_kernel(x1_ref, x2_ref,                      # resnet feats (bf16), csv (bf16, padded)
                    w1_ref, b1_ref, w2_ref, b2_ref,      # MLP branch
                    wc1a_ref, wc1b_ref, bc1_ref,         # combined layer 1 (split over concat)
                    wc2_ref, bc2_ref,                    # combined layer 2
                    wc3_ref, bc3_ref,                    # final classifier
                    o_ref):
    cd = w1_ref.dtype          # MXU compute dtype (bf16 by default); activations arrive in cd
    f32 = jnp.float32

    # ---- MLP branch: Linear -> ReLU -> Linear -> ReLU ----
    h = jnp.dot(x2_ref[...], w1_ref[...], preferred_element_type=f32)
    h = jnp.maximum(h + b1_ref[...], 0.0)
    m = jnp.dot(h.astype(cd), w2_ref[...], preferred_element_type=f32)
    m = jnp.maximum(m + b2_ref[...], 0.0)

    # ---- concat([resnet_feats, mlp_out]) @ Wc1 as a split matmul (no in-kernel concat) ----
    g = jnp.dot(x1_ref[...], wc1a_ref[...], preferred_element_type=f32)
    g = g + jnp.dot(m.astype(cd), wc1b_ref[...], preferred_element_type=f32)
    g = jnp.maximum(g + bc1_ref[...], 0.0)               # BN1 folded into Wc1/bc1

    # ---- combined layer 2 (BN folded) -> ReLU ----
    g = jnp.dot(g.astype(cd), wc2_ref[...], preferred_element_type=f32)
    g = jnp.maximum(g + bc2_ref[...], 0.0)

    # ---- final classifier ----
    y = jnp.dot(g.astype(cd), wc3_ref[...], preferred_element_type=f32) + bc3_ref[...]
    o_ref[...] = y.astype(o_ref.dtype)


# ----------------------------------------------------------------------------- helpers

def _round128(n):
    return ((n + 127) // 128) * 128


def _roundup(n, m):
    return ((n + m - 1) // m) * m


def _pad2(a, rows, cols):
    return jnp.pad(a, ((0, rows - a.shape[0]), (0, cols - a.shape[1])))


def _padb(b, cols):
    return jnp.pad(b, (0, cols - b.shape[0])).reshape(1, cols)


def fold_bn(w, b, gamma, beta, mean, var, eps=1e-5):
    """Fold an eval-mode BatchNorm1d into the preceding Linear (w: (in,out), b: (out,))."""
    scale = gamma / jnp.sqrt(var + eps)
    return w * scale[None, :], (b - mean) * scale + beta


def _pick_batch_tile(batch, *, min_rows, cap=512):
    """Prefer >=2 grid steps (both v7x TensorCores work) with tiles of at least `min_rows`
    rows (native sublane packing) and at most `cap` rows (amortizes the ~0.35us/step
    pipeline overhead and fills the 256-wide MXU on v6e/v7x)."""
    divisors = [t for t in range(min_rows, min(batch, cap) + 1) if batch % t == 0]
    multi = [t for t in divisors if batch // t >= 2]
    if multi:
        return max(multi)
    if divisors:
        return max(divisors)
    return batch


def _vmem_limit_bytes(weight_arrays, act_tile_bytes, weight_bufs):
    """Scoped-VMEM budget from the actual buffer footprint (+50% / +2MiB headroom)."""
    w_bytes = weight_bufs * sum(a.size * a.dtype.itemsize for a in weight_arrays)
    budget = int((w_bytes + act_tile_bytes) * 1.5) + (2 << 20)
    return max(16 << 20, min(budget, 64 << 20))            # <= v7x physical VMEM


# ----------------------------------------------------------------------------- param prep

def prepare_params(params, *, compute_dtype=jnp.bfloat16, n_resnet_features=512):
    """One-time prep: pad every lane dim to a multiple of 128, split wc1 over the concat,
    cast weights to the MXU compute dtype.  Zero padding is exact (padded inputs / weight
    rows / cols / bias entries are 0 and ReLU preserves 0).
    params = (w1,b1,w2,b2, wc1,bc1, wc2,bc2, wc3,bc3), BN already folded, weights (in,out)."""
    (w1, b1, w2, b2, wc1, bc1, wc2, bc2, wc3, bc3) = params

    F, H = w1.shape
    M = w2.shape[1]
    C1 = wc1.shape[1]
    C2 = wc2.shape[1]
    NC = wc3.shape[1]
    R = n_resnet_features
    assert wc1.shape[0] == R + M, "combined layer expects concat([resnet, mlp_out]) input"
    assert R % 128 == 0, "resnet feature dim must be lane aligned (512 for ResNet18)"
    assert C1 % 128 == 0, "combined hidden width (128 in the module) must be lane aligned"

    cd = compute_dtype
    Fp, Hp, Mp, C2p, NCp = map(_round128, (F, H, M, C2, NC))

    arrays = (
        _pad2(w1, Fp, Hp).astype(cd),          # w1p
        _padb(b1, Hp),                         # b1p (f32)
        _pad2(w2, Hp, Mp).astype(cd),          # w2p
        _padb(b2, Mp),                         # b2p
        wc1[:R, :].astype(cd),                 # wc1a: rows seeing the resnet features
        _pad2(wc1[R:, :], Mp, C1).astype(cd),  # wc1b: rows seeing the (padded) mlp output
        _padb(bc1, C1),                        # bc1p
        _pad2(wc2, C1, C2p).astype(cd),        # wc2p
        _padb(bc2, C2p),                       # bc2p
        _pad2(wc3, C2p, NCp).astype(cd),       # wc3p
        _padb(bc3, NCp),                       # bc3p
    )
    return {
        "arrays": tuple(jax.device_put(a) for a in arrays),
        "compute_dtype": cd,
        "n_classes": NC,
        "n_resnet_features": R,
        "csv_features": F,
        "csv_features_padded": Fp,
        "n_classes_padded": NCp,
    }


# ----------------------------------------------------------------------------- forward

def combined_forward(resnet_feats, csv_data, prepared, *, batch_tile=None):
    """resnet_feats: (B, 512) f32/bf16, csv_data: (B, F) f32/bf16, prepared: prepare_params()."""
    arrays = prepared["arrays"]
    cd = prepared["compute_dtype"]
    NC = prepared["n_classes"]
    R = prepared["n_resnet_features"]
    F = prepared["csv_features"]
    Fp = prepared["csv_features_padded"]
    NCp = prepared["n_classes_padded"]

    B = resnet_feats.shape[0]
    assert resnet_feats.shape[1] == R and csv_data.shape[1] == F

    # Activations go to the kernel in the MXU compute dtype; csv padded AFTER the cast.
    x1 = resnet_feats.astype(cd)
    x2 = jnp.pad(csv_data.astype(cd), ((0, 0), (0, Fp - F)))

    # Pad the batch to a sublane-friendly size (zero rows, sliced off after the call).
    itemsize = jnp.dtype(cd).itemsize
    min_rows = 8 * max(1, 4 // itemsize)                   # 8 rows f32, 16 rows bf16
    Bp = _roundup(max(B, 8), 8)
    if Bp != B:
        x1 = jnp.pad(x1, ((0, Bp - B), (0, 0)))
        x2 = jnp.pad(x2, ((0, Bp - B), (0, 0)))

    if batch_tile is None:
        batch_tile = _pick_batch_tile(Bp, min_rows=min_rows)
    assert Bp % batch_tile == 0, "padded batch must be divisible by batch_tile"
    grid = (Bp // batch_tile,)

    def run(single_buffer_weights):
        def row_spec(cols):
            return pl.BlockSpec((batch_tile, cols), lambda i: (i, 0))

        def const_spec(shape):
            idx = lambda i: (0,) * len(shape)
            if single_buffer_weights:
                # constant index_map across the grid -> never re-fetched -> 1 buffer suffices
                return pl.BlockSpec(shape, idx, pipeline_mode=pl.Buffered(1))
            return pl.BlockSpec(shape, idx)

        act_tile_bytes = 2 * batch_tile * (R + Fp) * itemsize \
                       + 2 * batch_tile * NCp * 4           # double-buffered in/out tiles
        vmem_limit = _vmem_limit_bytes(arrays, act_tile_bytes,
                                       weight_bufs=1 if single_buffer_weights else 2)

        return pl.pallas_call(
            combined_kernel,
            out_shape=jax.ShapeDtypeStruct((Bp, NCp), jnp.float32),
            grid_spec=pltpu.PrefetchScalarGridSpec(
                num_scalar_prefetch=0,
                grid=grid,
                in_specs=[row_spec(R), row_spec(Fp)]
                         + [const_spec(a.shape) for a in arrays],
                out_specs=row_spec(NCp),                     # lane-dense (>=128) output slab
            ),
            compiler_params=pltpu.CompilerParams(
                dimension_semantics=("parallel",),
                vmem_limit_bytes=vmem_limit,
            ),
        )(x1, x2, *arrays)

    try:
        out_padded = jax.block_until_ready(run(single_buffer_weights=True))
    except Exception:
        # pl.Buffered(1) not supported on this JAX version -> default double-buffering.
        out_padded = run(single_buffer_weights=False)

    return out_padded[:B, :NC]


# ----------------------------------------------------------------------------- reference

def reference_forward(resnet_feats, csv_data, params, compute_dtype=jnp.float32):
    (w1, b1, w2, b2, wc1, bc1, wc2, bc2, wc3, bc3) = params
    cd = compute_dtype

    def lin(x, w, b):
        return jnp.dot(x.astype(cd), w.astype(cd), preferred_element_type=jnp.float32) + b

    h = jnp.maximum(lin(csv_data, w1, b1), 0.0)
    m = jnp.maximum(lin(h, w2, b2), 0.0)
    c = jnp.concatenate([resnet_feats, m], axis=1)
    g = jnp.maximum(lin(c, wc1, bc1), 0.0)
    g = jnp.maximum(lin(g, wc2, bc2), 0.0)
    return lin(g, wc3, bc3)


# ----------------------------------------------------------------------------- demo / check

def _linear_init(kw, kb, fan_in, fan_out):
    bound = 1.0 / (fan_in ** 0.5)
    w = jax.random.uniform(kw, (fan_in, fan_out), jnp.float32, -bound, bound)
    b = jax.random.uniform(kb, (fan_out,), jnp.float32, -bound, bound)
    return w, b


def _bn_init(key, n):
    k1, k2, k3, k4 = jax.random.split(key, 4)
    gamma = jax.random.uniform(k1, (n,), jnp.float32, 0.5, 1.5)
    beta = 0.1 * jax.random.normal(k2, (n,), jnp.float32)
    mean = 0.1 * jax.random.normal(k3, (n,), jnp.float32)
    var = jax.random.uniform(k4, (n,), jnp.float32, 0.5, 1.5)
    return gamma, beta, mean, var


if __name__ == "__main__":
    # Small shapes consistent with the module.
    B = 16
    csv_in = 8          # numeric (csv) feature count
    mlp_hidden = 32
    mlp_out = 16        # mlp.layers[-2].out_features
    n_resnet = 512      # resnet18.fc.in_features
    n_classes = 10
    comb_h1, comb_h2 = 128, 16   # combined head widths from the module

    key = jax.random.PRNGKey(0)
    ks = jax.random.split(key, 16)

    # Inputs: precomputed resnet features (backbone not translated) + csv data.
    resnet_feats = jax.random.normal(ks[0], (B, n_resnet), jnp.float32)
    csv_data = jax.random.normal(ks[1], (B, csv_in), jnp.float32)

    # MLP branch parameters (Linear -> ReLU -> Linear -> ReLU).
    w1, b1 = _linear_init(ks[2], ks[3], csv_in, mlp_hidden)
    w2, b2 = _linear_init(ks[4], ks[5], mlp_hidden, mlp_out)

    # Combined head parameters; fold the two BatchNorm1d layers (eval mode) into the Linears.
    wc1_raw, bc1_raw = _linear_init(ks[6], ks[7], n_resnet + mlp_out, comb_h1)
    bn1 = _bn_init(ks[8], comb_h1)
    wc2_raw, bc2_raw = _linear_init(ks[9], ks[10], comb_h1, comb_h2)
    bn2 = _bn_init(ks[11], comb_h2)
    wc3, bc3 = _linear_init(ks[12], ks[13], comb_h2, n_classes)

    wc1, bc1 = fold_bn(wc1_raw, bc1_raw, *bn1)
    wc2, bc2 = fold_bn(wc2_raw, bc2_raw, *bn2)

    params = (w1, b1, w2, b2, wc1, bc1, wc2, bc2, wc3, bc3)

    # One-time weight prep (pad + split + bf16 cast) -- amortized across forward calls.
    prepared = prepare_params(params, compute_dtype=jnp.bfloat16, n_resnet_features=n_resnet)

    # Fused Pallas forward (bf16 MXU inputs, f32 accumulation).
    out = combined_forward(resnet_feats, csv_data, prepared)
    out = jax.block_until_ready(out)
    assert out.shape == (B, n_classes)

    # Check against a matching bf16-input reference (tight) and the pure f32 reference (loose).
    ref_bf16 = reference_forward(resnet_feats, csv_data, params, compute_dtype=jnp.bfloat16)
    ref_f32 = reference_forward(resnet_feats, csv_data, params, compute_dtype=jnp.float32)
    assert jnp.allclose(out, ref_bf16, atol=5e-3, rtol=5e-3), "mismatch vs bf16 reference"
    assert jnp.allclose(out, ref_f32, atol=3e-2, rtol=3e-2), "mismatch vs f32 reference"

    print("KERNEL_OK")
</pallas_src>

<mosaic_0001>
module attributes {stable_mosaic.version = 11 : i64} {
  func.func @combined_kernel(%arg0: i32, %arg1: memref<16x512xbf16, #tpu.memory_space<vmem>>, %arg2: memref<16x128xbf16, #tpu.memory_space<vmem>>, %arg3: memref<128x128xbf16, #tpu.memory_space<vmem>>, %arg4: memref<1x128xf32, #tpu.memory_space<vmem>>, %arg5: memref<128x128xbf16, #tpu.memory_space<vmem>>, %arg6: memref<1x128xf32, #tpu.memory_space<vmem>>, %arg7: memref<512x128xbf16, #tpu.memory_space<vmem>>, %arg8: memref<128x128xbf16, #tpu.memory_space<vmem>>, %arg9: memref<1x128xf32, #tpu.memory_space<vmem>>, %arg10: memref<128x128xbf16, #tpu.memory_space<vmem>>, %arg11: memref<1x128xf32, #tpu.memory_space<vmem>>, %arg12: memref<128x128xbf16, #tpu.memory_space<vmem>>, %arg13: memref<1x128xf32, #tpu.memory_space<vmem>>, %arg14: memref<16x128xf32, #tpu.memory_space<vmem>>) attributes {dimension_semantics = [#tpu.dimension_semantics<parallel>], iteration_bounds = array<i64: 1>, scalar_prefetch = 0 : i64, scratch_operands = 0 : i64, tpu.core_type = #tpu.core_type<tc>, window_params = [{transform_indices = @transform_0, window_bounds = array<i64: 16, 512>}, {transform_indices = @transform_1, window_bounds = array<i64: 16, 128>}, {pipeline_mode = #tpu.pipeline_mode<synchronous>, transform_indices = @transform_2, window_bounds = array<i64: 128, 128>}, {pipeline_mode = #tpu.pipeline_mode<synchronous>, transform_indices = @transform_3, window_bounds = array<i64: 1, 128>}, {pipeline_mode = #tpu.pipeline_mode<synchronous>, transform_indices = @transform_4, window_bounds = array<i64: 128, 128>}, {pipeline_mode = #tpu.pipeline_mode<synchronous>, transform_indices = @transform_5, window_bounds = array<i64: 1, 128>}, {pipeline_mode = #tpu.pipeline_mode<synchronous>, transform_indices = @transform_6, window_bounds = array<i64: 512, 128>}, {pipeline_mode = #tpu.pipeline_mode<synchronous>, transform_indices = @transform_7, window_bounds = array<i64: 128, 128>}, {pipeline_mode = #tpu.pipeline_mode<synchronous>, transform_indices = @transform_8, window_bounds = array<i64: 1, 128>}, {pipeline_mode = #tpu.pipeline_mode<synchronous>, transform_indices = @transform_9, window_bounds = array<i64: 128, 128>}, {pipeline_mode = #tpu.pipeline_mode<synchronous>, transform_indices = @transform_10, window_bounds = array<i64: 1, 128>}, {pipeline_mode = #tpu.pipeline_mode<synchronous>, transform_indices = @transform_11, window_bounds = array<i64: 128, 128>}, {pipeline_mode = #tpu.pipeline_mode<synchronous>, transform_indices = @transform_12, window_bounds = array<i64: 1, 128>}, {transform_indices = @transform_13, window_bounds = array<i64: 16, 128>}]} {
    %c0 = arith.constant 0 : index
    %c0_0 = arith.constant 0 : index
    %0 = vector.load %arg2[%c0, %c0_0] : memref<16x128xbf16, #tpu.memory_space<vmem>>, vector<16x128xbf16>
    %c0_1 = arith.constant 0 : index
    %c0_2 = arith.constant 0 : index
    %1 = vector.load %arg3[%c0_1, %c0_2] : memref<128x128xbf16, #tpu.memory_space<vmem>>, vector<128x128xbf16>
    %cst = arith.constant dense<0.000000e+00> : vector<16x128xf32>
    %2 = tpu.matmul %0, %1, %cst {dimension_numbers = #tpu.dot_dimension_numbers<[1], [0], [0], [1], [0, 0, 1, 1], [], []>} : vector<16x128xbf16>, vector<128x128xbf16>, vector<16x128xf32> -> vector<16x128xf32>
    %c0_3 = arith.constant 0 : index
    %c0_4 = arith.constant 0 : index
    %3 = vector.load %arg4[%c0_3, %c0_4] : memref<1x128xf32, #tpu.memory_space<vmem>>, vector<1x128xf32>
    %4 = vector.broadcast %3 : vector<1x128xf32> to vector<16x128xf32>
    %5 = arith.addf %2, %4 : vector<16x128xf32>
    %cst_5 = arith.constant 0.000000e+00 : f32
    %6 = vector.broadcast %cst_5 : f32 to vector<16x128xf32>
    %7 = arith.maximumf %5, %6 : vector<16x128xf32>
    %8 = arith.truncf %7 : vector<16x128xf32> to vector<16x128xbf16>
    %c0_6 = arith.constant 0 : index
    %c0_7 = arith.constant 0 : index
    %9 = vector.load %arg5[%c0_6, %c0_7] : memref<128x128xbf16, #tpu.memory_space<vmem>>, vector<128x128xbf16>
    %cst_8 = arith.constant dense<0.000000e+00> : vector<16x128xf32>
    %10 = tpu.matmul %8, %9, %cst_8 {dimension_numbers = #tpu.dot_dimension_numbers<[1], [0], [0], [1], [0, 0, 1, 1], [], []>} : vector<16x128xbf16>, vector<128x128xbf16>, vector<16x128xf32> -> vector<16x128xf32>
    %c0_9 = arith.constant 0 : index
    %c0_10 = arith.constant 0 : index
    %11 = vector.load %arg6[%c0_9, %c0_10] : memref<1x128xf32, #tpu.memory_space<vmem>>, vector<1x128xf32>
    %12 = vector.broadcast %11 : vector<1x128xf32> to vector<16x128xf32>
    %13 = arith.addf %10, %12 : vector<16x128xf32>
    %cst_11 = arith.constant 0.000000e+00 : f32
    %14 = vector.broadcast %cst_11 : f32 to vector<16x128xf32>
    %15 = arith.maximumf %13, %14 : vector<16x128xf32>
    %c0_12 = arith.constant 0 : index
    %c0_13 = arith.constant 0 : index
    %16 = vector.load %arg1[%c0_12, %c0_13] : memref<16x512xbf16, #tpu.memory_space<vmem>>, vector<16x512xbf16>
    %c0_14 = arith.constant 0 : index
    %c0_15 = arith.constant 0 : index
    %17 = vector.load %arg7[%c0_14, %c0_15] : memref<512x128xbf16, #tpu.memory_space<vmem>>, vector<512x128xbf16>
    %cst_16 = arith.constant dense<0.000000e+00> : vector<16x128xf32>
    %18 = tpu.matmul %16, %17, %cst_16 {dimension_numbers = #tpu.dot_dimension_numbers<[1], [0], [0], [1], [0, 0, 1, 1], [], []>} : vector<16x512xbf16>, vector<512x128xbf16>, vector<16x128xf32> -> vector<16x128xf32>
    %19 = arith.truncf %15 : vector<16x128xf32> to vector<16x128xbf16>
    %c0_17 = arith.constant 0 : index
    %c0_18 = arith.constant 0 : index
    %20 = vector.load %arg8[%c0_17, %c0_18] : memref<128x128xbf16, #tpu.memory_space<vmem>>, vector<128x128xbf16>
    %cst_19 = arith.constant dense<0.000000e+00> : vector<16x128xf32>
    %21 = tpu.matmul %19, %20, %cst_19 {dimension_numbers = #tpu.dot_dimension_numbers<[1], [0], [0], [1], [0, 0, 1, 1], [], []>} : vector<16x128xbf16>, vector<128x128xbf16>, vector<16x128xf32> -> vector<16x128xf32>
    %22 = arith.addf %18, %21 : vector<16x128xf32>
    %c0_20 = arith.constant 0 : index
    %c0_21 = arith.constant 0 : index
    %23 = vector.load %arg9[%c0_20, %c0_21] : memref<1x128xf32, #tpu.memory_space<vmem>>, vector<1x128xf32>
    %24 = vector.broadcast %23 : vector<1x128xf32> to vector<16x128xf32>
    %25 = arith.addf %22, %24 : vector<16x128xf32>
    %cst_22 = arith.constant 0.000000e+00 : f32
    %26 = vector.broadcast %cst_22 : f32 to vector<16x128xf32>
    %27 = arith.maximumf %25, %26 : vector<16x128xf32>
    %28 = arith.truncf %27 : vector<16x128xf32> to vector<16x128xbf16>
    %c0_23 = arith.constant 0 : index
    %c0_24 = arith.constant 0 : index
    %29 = vector.load %arg10[%c0_23, %c0_24] : memref<128x128xbf16, #tpu.memory_space<vmem>>, vector<128x128xbf16>
    %cst_25 = arith.constant dense<0.000000e+00> : vector<16x128xf32>
    %30 = tpu.matmul %28, %29, %cst_25 {dimension_numbers = #tpu.dot_dimension_numbers<[1], [0], [0], [1], [0, 0, 1, 1], [], []>} : vector<16x128xbf16>, vector<128x128xbf16>, vector<16x128xf32> -> vector<16x128xf32>
    %c0_26 = arith.constant 0 : index
    %c0_27 = arith.constant 0 : index
    %31 = vector.load %arg11[%c0_26, %c0_27] : memref<1x128xf32, #tpu.memory_space<vmem>>, vector<1x128xf32>
    %32 = vector.broadcast %31 : vector<1x128xf32> to vector<16x128xf32>
    %33 = arith.addf %30, %32 : vector<16x128xf32>
    %cst_28 = arith.constant 0.000000e+00 : f32
    %34 = vector.broadcast %cst_28 : f32 to vector<16x128xf32>
    %35 = arith.maximumf %33, %34 : vector<16x128xf32>
    %36 = arith.truncf %35 : vector<16x128xf32> to vector<16x128xbf16>
    %c0_29 = arith.constant 0 : index
    %c0_30 = arith.constant 0 : index
    %37 = vector.load %arg12[%c0_29, %c0_30] : memref<128x128xbf16, #tpu.memory_space<vmem>>, vector<128x128xbf16>
    %cst_31 = arith.constant dense<0.000000e+00> : vector<16x128xf32>
    %38 = tpu.matmul %36, %37, %cst_31 {dimension_numbers = #tpu.dot_dimension_numbers<[1], [0], [0], [1], [0, 0, 1, 1], [], []>} : vector<16x128xbf16>, vector<128x128xbf16>, vector<16x128xf32> -> vector<16x128xf32>
    %c0_32 = arith.constant 0 : index
    %c0_33 = arith.constant 0 : index
    %39 = vector.load %arg13[%c0_32, %c0_33] : memref<1x128xf32, #tpu.memory_space<vmem>>, vector<1x128xf32>
    %40 = vector.broadcast %39 : vector<1x128xf32> to vector<16x128xf32>
    %41 = arith.addf %38, %40 : vector<16x128xf32>
    %c0_34 = arith.constant 0 : index
    %c0_35 = arith.constant 0 : index
    %42 = vector.load %arg14[%c0_34, %c0_35] : memref<16x128xf32, #tpu.memory_space<vmem>>, vector<16x128xf32>
    tpu.vector_store %arg14[%c0_34, %c0_35], %41 {strides = array<i32>} : memref<16x128xf32, #tpu.memory_space<vmem>>, vector<16x128xf32>,
    return
  }
  func.func @transform_0(%arg0: i32) -> (i32, i32) {
    %c0_i32 = arith.constant 0 : i32
    %c0_i32_0 = arith.constant 0 : i32
    return %arg0, %c0_i32 : i32, i32
  }
  func.func @transform_1(%arg0: i32) -> (i32, i32) {
    %c0_i32 = arith.constant 0 : i32
    %c0_i32_0 = arith.constant 0 : i32
    return %arg0, %c0_i32 : i32, i32
  }
  func.func @transform_2(%arg0: i32) -> (i32, i32) {
    %c0_i32 = arith.constant 0 : i32
    %c0_i32_0 = arith.constant 0 : i32
    %c0_i32_1 = arith.constant 0 : i32
    return %c0_i32, %c0_i32_0 : i32, i32
  }
  func.func @transform_3(%arg0: i32) -> (i32, i32) {
    %c0_i32 = arith.constant 0 : i32
    %c0_i32_0 = arith.constant 0 : i32
    %c0_i32_1 = arith.constant 0 : i32
    return %c0_i32, %c0_i32_0 : i32, i32
  }
  func.func @transform_4(%arg0: i32) -> (i32, i32) {
    %c0_i32 = arith.constant 0 : i32
    %c0_i32_0 = arith.constant 0 : i32
    %c0_i32_1 = arith.constant 0 : i32
    return %c0_i32, %c0_i32_0 : i32, i32
  }
  func.func @transform_5(%arg0: i32) -> (i32, i32) {
    %c0_i32 = arith.constant 0 : i32
    %c0_i32_0 = arith.constant 0 : i32
    %c0_i32_1 = arith.constant 0 : i32
    return %c0_i32, %c0_i32_0 : i32, i32
  }
  func.func @transform_6(%arg0: i32) -> (i32, i32) {
    %c0_i32 = arith.constant 0 : i32
    %c0_i32_0 = arith.constant 0 : i32
    %c0_i32_1 = arith.constant 0 : i32
    return %c0_i32, %c0_i32_0 : i32, i32
  }
  func.func @transform_7(%arg0: i32) -> (i32, i32) {
    %c0_i32 = arith.constant 0 : i32
    %c0_i32_0 = arith.constant 0 : i32
    %c0_i32_1 = arith.constant 0 : i32
    return %c0_i32, %c0_i32_0 : i32, i32
  }
  func.func @transform_8(%arg0: i32) -> (i32, i32) {
    %c0_i32 = arith.constant 0 : i32
    %c0_i32_0 = arith.constant 0 : i32
    %c0_i32_1 = arith.constant 0 : i32
    return %c0_i32, %c0_i32_0 : i32, i32
  }
  func.func @transform_9(%arg0: i32) -> (i32, i32) {
    %c0_i32 = arith.constant 0 : i32
    %c0_i32_0 = arith.constant 0 : i32
    %c0_i32_1 = arith.constant 0 : i32
    return %c0_i32, %c0_i32_0 : i32, i32
  }
  func.func @transform_10(%arg0: i32) -> (i32, i32) {
    %c0_i32 = arith.constant 0 : i32
    %c0_i32_0 = arith.constant 0 : i32
    %c0_i32_1 = arith.constant 0 : i32
    return %c0_i32, %c0_i32_0 : i32, i32
  }
  func.func @transform_11(%arg0: i32) -> (i32, i32) {
    %c0_i32 = arith.constant 0 : i32
    %c0_i32_0 = arith.constant 0 : i32
    %c0_i32_1 = arith.constant 0 : i32
    return %c0_i32, %c0_i32_0 : i32, i32
  }
  func.func @transform_12(%arg0: i32) -> (i32, i32) {
    %c0_i32 = arith.constant 0 : i32
    %c0_i32_0 = arith.constant 0 : i32
    %c0_i32_1 = arith.constant 0 : i32
    return %c0_i32, %c0_i32_0 : i32, i32
  }
  func.func @transform_13(%arg0: i32) -> (i32, i32) {
    %c0_i32 = arith.constant 0 : i32
    %c0_i32_0 = arith.constant 0 : i32
    return %arg0, %c0_i32 : i32, i32
  }
}

module attributes {stable_mosaic.version = 11 : i64} {
  func.func @combined_kernel(%arg0: i32, %arg1: memref<16x512xbf16, #tpu.memory_space<vmem>>, %arg2: memref<16x128xbf16, #tpu.memory_space<vmem>>, %arg3: memref<128x128xbf16, #tpu.memory_space<vmem>>, %arg4: memref<1x128xf32, #tpu.memory_space<vmem>>, %arg5: memref<128x128xbf16, #tpu.memory_space<vmem>>, %arg6: memref<1x128xf32, #tpu.memory_space<vmem>>, %arg7: memref<512x128xbf16, #tpu.memory_space<vmem>>, %arg8: memref<128x128xbf16, #tpu.memory_space<vmem>>, %arg9: memref<1x128xf32, #tpu.memory_space<vmem>>, %arg10: memref<128x128xbf16, #tpu.memory_space<vmem>>, %arg11: memref<1x128xf32, #tpu.memory_space<vmem>>, %arg12: memref<128x128xbf16, #tpu.memory_space<vmem>>, %arg13: memref<1x128xf32, #tpu.memory_space<vmem>>, %arg14: memref<16x128xf32, #tpu.memory_space<vmem>>) attributes {dimension_semantics = [#tpu.dimension_semantics<parallel>], iteration_bounds = array<i64: 1>, scalar_prefetch = 0 : i64, scratch_operands = 0 : i64, tpu.core_type = #tpu.core_type<tc>, window_params = [{transform_indices = @transform_0, window_bounds = array<i64: 16, 512>}, {transform_indices = @transform_1, window_bounds = array<i64: 16, 128>}, {pipeline_mode = #tpu.pipeline_mode<synchronous>, transform_indices = @transform_2, window_bounds = array<i64: 128, 128>}, {pipeline_mode = #tpu.pipeline_mode<synchronous>, transform_indices = @transform_3, window_bounds = array<i64: 1, 128>}, {pipeline_mode = #tpu.pipeline_mode<synchronous>, transform_indices = @transform_4, window_bounds = array<i64: 128, 128>}, {pipeline_mode = #tpu.pipeline_mode<synchronous>, transform_indices = @transform_5, window_bounds = array<i64: 1, 128>}, {pipeline_mode = #tpu.pipeline_mode<synchronous>, transform_indices = @transform_6, window_bounds = array<i64: 512, 128>}, {pipeline_mode = #tpu.pipeline_mode<synchronous>, transform_indices = @transform_7, window_bounds = array<i64: 128, 128>}, {pipeline_mode = #tpu.pipeline_mode<synchronous>, transform_indices = @transform_8, window_bounds = array<i64: 1, 128>}, {pipeline_mode = #tpu.pipeline_mode<synchronous>, transform_indices = @transform_9, window_bounds = array<i64: 128, 128>}, {pipeline_mode = #tpu.pipeline_mode<synchronous>, transform_indices = @transform_10, window_bounds = array<i64: 1, 128>}, {pipeline_mode = #tpu.pipeline_mode<synchronous>, transform_indices = @transform_11, window_bounds = array<i64: 128, 128>}, {pipeline_mode = #tpu.pipeline_mode<synchronous>, transform_indices = @transform_12, window_bounds = array<i64: 1, 128>}, {transform_indices = @transform_13, window_bounds = array<i64: 16, 128>}]} {
    %c0 = arith.constant 0 : index
    %c0_0 = arith.constant 0 : index
    %0 = vector.load %arg2[%c0, %c0_0] : memref<16x128xbf16, #tpu.memory_space<vmem>>, vector<16x128xbf16>
    %c0_1 = arith.constant 0 : index
    %c0_2 = arith.constant 0 : index
    %1 = vector.load %arg3[%c0_1, %c0_2] : memref<128x128xbf16, #tpu.memory_space<vmem>>, vector<128x128xbf16>
    %cst = arith.constant dense<0.000000e+00> : vector<16x128xf32>
    %2 = tpu.matmul %0, %1, %cst {dimension_numbers = #tpu.dot_dimension_numbers<[1], [0], [0], [1], [0, 0, 1, 1], [], []>} : vector<16x128xbf16>, vector<128x128xbf16>, vector<16x128xf32> -> vector<16x128xf32>
    %c0_3 = arith.constant 0 : index
    %c0_4 = arith.constant 0 : index
    %3 = vector.load %arg4[%c0_3, %c0_4] : memref<1x128xf32, #tpu.memory_space<vmem>>, vector<1x128xf32>
    %4 = vector.broadcast %3 : vector<1x128xf32> to vector<16x128xf32>
    %5 = arith.addf %2, %4 : vector<16x128xf32>
    %cst_5 = arith.constant 0.000000e+00 : f32
    %6 = vector.broadcast %cst_5 : f32 to vector<16x128xf32>
    %7 = arith.maximumf %5, %6 : vector<16x128xf32>
    %8 = arith.truncf %7 : vector<16x128xf32> to vector<16x128xbf16>
    %c0_6 = arith.constant 0 : index
    %c0_7 = arith.constant 0 : index
    %9 = vector.load %arg5[%c0_6, %c0_7] : memref<128x128xbf16, #tpu.memory_space<vmem>>, vector<128x128xbf16>
    %cst_8 = arith.constant dense<0.000000e+00> : vector<16x128xf32>
    %10 = tpu.matmul %8, %9, %cst_8 {dimension_numbers = #tpu.dot_dimension_numbers<[1], [0], [0], [1], [0, 0, 1, 1], [], []>} : vector<16x128xbf16>, vector<128x128xbf16>, vector<16x128xf32> -> vector<16x128xf32>
    %c0_9 = arith.constant 0 : index
    %c0_10 = arith.constant 0 : index
    %11 = vector.load %arg6[%c0_9, %c0_10] : memref<1x128xf32, #tpu.memory_space<vmem>>, vector<1x128xf32>
    %12 = vector.broadcast %11 : vector<1x128xf32> to vector<16x128xf32>
    %13 = arith.addf %10, %12 : vector<16x128xf32>
    %cst_11 = arith.constant 0.000000e+00 : f32
    %14 = vector.broadcast %cst_11 : f32 to vector<16x128xf32>
    %15 = arith.maximumf %13, %14 : vector<16x128xf32>
    %c0_12 = arith.constant 0 : index
    %c0_13 = arith.constant 0 : index
    %16 = vector.load %arg1[%c0_12, %c0_13] : memref<16x512xbf16, #tpu.memory_space<vmem>>, vector<16x512xbf16>
    %c0_14 = arith.constant 0 : index
    %c0_15 = arith.constant 0 : index
    %17 = vector.load %arg7[%c0_14, %c0_15] : memref<512x128xbf16, #tpu.memory_space<vmem>>, vector<512x128xbf16>
    %cst_16 = arith.constant dense<0.000000e+00> : vector<16x128xf32>
    %18 = tpu.matmul %16, %17, %cst_16 {dimension_numbers = #tpu.dot_dimension_numbers<[1], [0], [0], [1], [0, 0, 1, 1], [], []>} : vector<16x512xbf16>, vector<512x128xbf16>, vector<16x128xf32> -> vector<16x128xf32>
    %19 = arith.truncf %15 : vector<16x128xf32> to vector<16x128xbf16>
    %c0_17 = arith.constant 0 : index
    %c0_18 = arith.constant 0 : index
    %20 = vector.load %arg8[%c0_17, %c0_18] : memref<128x128xbf16, #tpu.memory_space<vmem>>, vector<128x128xbf16>
    %cst_19 = arith.constant dense<0.000000e+00> : vector<16x128xf32>
    %21 = tpu.matmul %19, %20, %cst_19 {dimension_numbers = #tpu.dot_dimension_numbers<[1], [0], [0], [1], [0, 0, 1, 1], [], []>} : vector<16x128xbf16>, vector<128x128xbf16>, vector<16x128xf32> -> vector<16x128xf32>
    %22 = arith.addf %18, %21 : vector<16x128xf32>
    %c0_20 = arith.constant 0 : index
    %c0_21 = arith.constant 0 : index
    %23 = vector.load %arg9[%c0_20, %c0_21] : memref<1x128xf32, #tpu.memory_space<vmem>>, vector<1x128xf32>
    %24 = vector.broadcast %23 : vector<1x128xf32> to vector<16x128xf32>
    %25 = arith.addf %22, %24 : vector<16x128xf32>
    %cst_22 = arith.constant 0.000000e+00 : f32
    %26 = vector.broadcast %cst_22 : f32 to vector<16x128xf32>
    %27 = arith.maximumf %25, %26 : vector<16x128xf32>
    %28 = arith.truncf %27 : vector<16x128xf32> to vector<16x128xbf16>
    %c0_23 = arith.constant 0 : index
    %c0_24 = arith.constant 0 : index
    %29 = vector.load %arg10[%c0_23, %c0_24] : memref<128x128xbf16, #tpu.memory_space<vmem>>, vector<128x128xbf16>
    %cst_25 = arith.constant dense<0.000000e+00> : vector<16x128xf32>
    %30 = tpu.matmul %28, %29, %cst_25 {dimension_numbers = #tpu.dot_dimension_numbers<[1], [0], [0], [1], [0, 0, 1, 1], [], []>} : vector<16x128xbf16>, vector<128x128xbf16>, vector<16x128xf32> -> vector<16x128xf32>
    %c0_26 = arith.constant 0 : index
    %c0_27 = arith.constant 0 : index
    %31 = vector.load %arg11[%c0_26, %c0_27] : memref<1x128xf32, #tpu.memory_space<vmem>>, vector<1x128xf32>
    %32 = vector.broadcast %31 : vector<1x128xf32> to vector<16x128xf32>
    %33 = arith.addf %30, %32 : vector<16x128xf32>
    %cst_28 = arith.constant 0.000000e+00 : f32
    %34 = vector.broadcast %cst_28 : f32 to vector<16x128xf32>
    %35 = arith.maximumf %33, %34 : vector<16x128xf32>
    %36 = arith.truncf %35 : vector<16x128xf32> to vector<16x128xbf16>
    %c0_29 = arith.constant 0 : index
    %c0_30 = arith.constant 0 : index
    %37 = vector.load %arg12[%c0_29, %c0_30] : memref<128x128xbf16, #tpu.memory_space<vmem>>, vector<128x128xbf16>
    %cst_31 = arith.constant dense<0.000000e+00> : vector<16x128xf32>
    %38 = tpu.matmul %36, %37, %cst_31 {dimension_numbers = #tpu.dot_dimension_numbers<[1], [0], [0], [1], [0, 0, 1, 1], [], []>} : vector<16x128xbf16>, vector<128x128xbf16>, vector<16x128xf32> -> vector<16x128xf32>
    %c0_32 = arith.constant 0 : index
    %c0_33 = arith.constant 0 : index
    %39 = vector.load %arg13[%c0_32, %c0_33] : memref<1x128xf32, #tpu.memory_space<vmem>>, vector<1x128xf32>
    %40 = vector.broadcast %39 : vector<1x128xf32> to vector<16x128xf32>
    %41 = arith.addf %38, %40 : vector<16x128xf32>
    %c0_34 = arith.constant 0 : index
    %c0_35 = arith.constant 0 : index
    %42 = vector.load %arg14[%c0_34, %c0_35] : memref<16x128xf32, #tpu.memory_space<vmem>>, vector<16x128xf32>
    tpu.vector_store %arg14[%c0_34, %c0_35], %41 {strides = array<i32>} : memref<16x128xf32, #tpu.memory_space<vmem>>, vector<16x128xf32>,
    return
  }
  func.func @transform_0(%arg0: i32) -> (i32, i32) {
    %c0_i32 = arith.constant 0 : i32
    %c0_i32_0 = arith.constant 0 : i32
    return %arg0, %c0_i32 : i32, i32
  }
  func.func @transform_1(%arg0: i32) -> (i32, i32) {
    %c0_i32 = arith.constant 0 : i32
    %c0_i32_0 = arith.constant 0 : i32
    return %arg0, %c0_i32 : i32, i32
  }
  func.func @transform_2(%arg0: i32) -> (i32, i32) {
    %c0_i32 = arith.constant 0 : i32
    %c0_i32_0 = arith.constant 0 : i32
    %c0_i32_1 = arith.constant 0 : i32
    return %c0_i32, %c0_i32_0 : i32, i32
  }
  func.func @transform_3(%arg0: i32) -> (i32, i32) {
    %c0_i32 = arith.constant 0 : i32
    %c0_i32_0 = arith.constant 0 : i32
    %c0_i32_1 = arith.constant 0 : i32
    return %c0_i32, %c0_i32_0 : i32, i32
  }
  func.func @transform_4(%arg0: i32) -> (i32, i32) {
    %c0_i32 = arith.constant 0 : i32
    %c0_i32_0 = arith.constant 0 : i32
    %c0_i32_1 = arith.constant 0 : i32
    return %c0_i32, %c0_i32_0 : i32, i32
  }
  func.func @transform_5(%arg0: i32) -> (i32, i32) {
    %c0_i32 = arith.constant 0 : i32
    %c0_i32_0 = arith.constant 0 : i32
    %c0_i32_1 = arith.constant 0 : i32
    return %c0_i32, %c0_i32_0 : i32, i32
  }
  func.func @transform_6(%arg0: i32) -> (i32, i32) {
    %c0_i32 = arith.constant 0 : i32
    %c0_i32_0 = arith.constant 0 : i32
    %c0_i32_1 = arith.constant 0 : i32
    return %c0_i32, %c0_i32_0 : i32, i32
  }
  func.func @transform_7(%arg0: i32) -> (i32, i32) {
    %c0_i32 = arith.constant 0 : i32
    %c0_i32_0 = arith.constant 0 : i32
    %c0_i32_1 = arith.constant 0 : i32
    return %c0_i32, %c0_i32_0 : i32, i32
  }
  func.func @transform_8(%arg0: i32) -> (i32, i32) {
    %c0_i32 = arith.constant 0 : i32
    %c0_i32_0 = arith.constant 0 : i32
    %c0_i32_1 = arith.constant 0 : i32
    return %c0_i32, %c0_i32_0 : i32, i32
  }
  func.func @transform_9(%arg0: i32) -> (i32, i32) {
    %c0_i32 = arith.constant 0 : i32
    %c0_i32_0 = arith.constant 0 : i32
    %c0_i32_1 = arith.constant 0 : i32
    return %c0_i32, %c0_i32_0 : i32, i32
  }
  func.func @transform_10(%arg0: i32) -> (i32, i32) {
    %c0_i32 = arith.constant 0 : i32
    %c0_i32_0 = arith.constant 0 : i32
    %c0_i32_1 = arith.constant 0 : i32
    return %c0_i32, %c0_i32_0 : i32, i32
  }
  func.func @transform_11(%arg0: i32) -> (i32, i32) {
    %c0_i32 = arith.constant 0 : i32
    %c0_i32_0 = arith.constant 0 : i32
    %c0_i32_1 = arith.constant 0 : i32
    return %c0_i32, %c0_i32_0 : i32, i32
  }
  func.func @transform_12(%arg0: i32) -> (i32, i32) {
    %c0_i32 = arith.constant 0 : i32
    %c0_i32_0 = arith.constant 0 : i32
    %c0_i32_1 = arith.constant 0 : i32
    return %c0_i32, %c0_i32_0 : i32, i32
  }
  func.func @transform_13(%arg0: i32) -> (i32, i32) {
    %c0_i32 = arith.constant 0 : i32
    %c0_i32_0 = arith.constant 0 : i32
    return %arg0, %c0_i32 : i32, i32
  }
}

</mosaic_0001>

<llo_original>
// kernel: tpu_custom_call.1
$region0: #{tpu_custom_call.1}
  #allocation0 [shape = 'u32[]', space=smem, size = 0x4, offset = 0x4, fixed_abs, tag = 'smem constant byte address 0x4 - core index']
  #allocation1 [shape = 'u32[144,128]{1,0:T(1,128)}', space=vmem, size = 0x12000, scoped, tag = 'internal scratch']
  %s0 = inlined_call_operand.hbm [shape: bf16[16,512], index: 0, kind: input, shape index: {}]
  %s1 = inlined_call_operand.hbm [shape: bf16[16,128], index: 1, kind: input, shape index: {}]
  %s2 = inlined_call_operand.hbm [shape: bf16[128,128], index: 2, kind: input, shape index: {}]
  %s3 = inlined_call_operand.vmem [shape: f32[1,128], index: 3, kind: input, shape index: {}]
  %s4 = inlined_call_operand.hbm [shape: bf16[128,128], index: 4, kind: input, shape index: {}]
  %s5 = inlined_call_operand.vmem [shape: f32[1,128], index: 5, kind: input, shape index: {}]
  %s6 = inlined_call_operand.hbm [shape: bf16[512,128], index: 6, kind: input, shape index: {}]
  %s7 = inlined_call_operand.hbm [shape: bf16[128,128], index: 7, kind: input, shape index: {}]
  %s8 = inlined_call_operand.vmem [shape: f32[1,128], index: 8, kind: input, shape index: {}]
  %s9 = inlined_call_operand.hbm [shape: bf16[128,128], index: 9, kind: input, shape index: {}]
  %s10 = inlined_call_operand.vmem [shape: f32[1,128], index: 10, kind: input, shape index: {}]
  %s11 = inlined_call_operand.hbm [shape: bf16[128,128], index: 11, kind: input, shape index: {}]
  %s12 = inlined_call_operand.vmem [shape: f32[1,128], index: 12, kind: input, shape index: {}]
  %s13 = inlined_call_operand.hbm [shape: f32[16,128], index: 13, kind: output, shape index: {}]
  %s14 = sld [smem:[#allocation0]]
  $region94: #{tpu_custom_call.1} parent=0
    _
  %s16 = ssub.s32 1, %s14
  %s17 = scalar_select 0, %s16, %s14
  $region1: #{tpu_custom_call.1} parent=0
    #allocation2 [shape = 'u8[16384]{0}', space=vmem, size = 0x4000, scoped, tag = 'input window, operand 0, single buffered']
    #allocation3 [shape = 's32[1]{0}', space=sflag, size = 0x4, scoped, tag = 'scoped memory for tpu_custom_call.1']
    #allocation4 [shape = 's32[1]{0}', space=sflag, size = 0x4, scoped, tag = 'scoped memory for tpu_custom_call.1']
    #allocation5 [shape = 'u8[4096]{0}', space=vmem, size = 0x1000, scoped, tag = 'input window, operand 1, single buffered']
    #allocation6 [shape = 's32[1]{0}', space=sflag, size = 0x4, scoped, tag = 'scoped memory for tpu_custom_call.1']
    #allocation7 [shape = 'u8[32768]{0}', space=vmem, size = 0x8000, scoped, tag = 'input window, operand 2, single buffered']
    #allocation8 [shape = 'u8[32768]{0}', space=vmem, size = 0x8000, scoped, tag = 'input window, operand 4, single buffered']
    #allocation9 [shape = 's32[1]{0}', space=sflag, size = 0x4, scoped, tag = 'scoped memory for tpu_custom_call.1']
    #allocation10 [shape = 'u8[131072]{0}', space=vmem, size = 0x20000, scoped, tag = 'input window, operand 6, single buffered']
    #allocation11 [shape = 'u8[32768]{0}', space=vmem, size = 0x8000, scoped, tag = 'input window, operand 7, single buffered']
    #allocation12 [shape = 's32[1]{0}', space=sflag, size = 0x4, scoped, tag = 'scoped memory for tpu_custom_call.1']
    #allocation13 [shape = 'u8[32768]{0}', space=vmem, size = 0x8000, scoped, tag = 'input window, operand 9, single buffered']
    #allocation14 [shape = 'u8[32768]{0}', space=vmem, size = 0x8000, scoped, tag = 'input window, operand 11, single buffered']
    #allocation15 [shape = 's32[1]{0}', space=sflag, size = 0x4, scoped, tag = 'scoped memory for tpu_custom_call.1']
    #allocation16 [shape = 'u8[8192]{0}', space=vmem, size = 0x2000, scoped, tag = 'output window, operand 0, single buffered']
    %18 = vsyncpa [#allocation3], 0
    %19 = vsyncpa [#allocation6], 0
    %20 = vsyncpa [#allocation9], 0
    %21 = vsyncpa [#allocation12], 0
    %22 = vsyncpa [#allocation15], 0
    %23 = vsyncpa [#allocation4], 0
    // Predicated region
    $region2: #{tpu_custom_call.1} parent=1 // pred_check
      _
    $region3: #{tpu_custom_call.1} parent=1 // pred_check_branch
      %25 = sbr.rel (0) target = $region5
    $region4: #{tpu_custom_call.1} parent=1 // pred_region
      %s27 = ssub.s32 512, 512
      %28 = vsyncadd [#allocation3], %s27
      %s29 = sshll.u32 [#allocation2], 4
      %s30 = int_to_ptr.vmem [resolvable:$true] %s29
      %35 = dma.hbm_to_vmem [thread:$0]  %s0, 512, %s30, [#allocation3], 256, 256, 16
    $region5: #{tpu_custom_call.1} parent=1 // pred_fallthru
      _
    // Predicated region
    $region6: #{tpu_custom_call.1} parent=1 // pred_check
      _
    $region7: #{tpu_custom_call.1} parent=1 // pred_check_branch
      %37 = sbr.rel (0) target = $region9
    $region8: #{tpu_custom_call.1} parent=1 // pred_region
      %s39 = ssub.s32 128, 128
      %40 = vsyncadd [#allocation6], %s39
      %s41 = sshll.u32 [#allocation5], 4
      %s42 = int_to_ptr.vmem [resolvable:$true] %s41
      %47 = dma.hbm_to_vmem [thread:$0]  %s1, 128, %s42, [#allocation6], 64, 64, 4
    $region9: #{tpu_custom_call.1} parent=1 // pred_fallthru
      _
    // Predicated region
    $region10: #{tpu_custom_call.1} parent=1 // pred_check
      _
    $region11: #{tpu_custom_call.1} parent=1 // pred_check_branch
      %49 = sbr.rel (0) target = $region13
    $region12: #{tpu_custom_call.1} parent=1 // pred_region
      %s51 = ssub.s32 1024, 1024
      %52 = vsyncadd [#allocation6], %s51
      %s53 = sshll.u32 [#allocation7], 4
      %s54 = int_to_ptr.vmem [resolvable:$true] %s53
      %59 = dma.hbm_to_vmem [thread:$0]  %s2, 1024, %s54, [#allocation6], 64, 64, 4
    $region13: #{tpu_custom_call.1} parent=1 // pred_fallthru
      _
    // Predicated region
    $region14: #{tpu_custom_call.1} parent=1 // pred_check
      _
    $region15: #{tpu_custom_call.1} parent=1 // pred_check_branch
      %61 = sbr.rel (0) target = $region17
    $region16: #{tpu_custom_call.1} parent=1 // pred_region
      _
    $region17: #{tpu_custom_call.1} parent=1 // pred_fallthru
      _
    // Predicated region
    $region18: #{tpu_custom_call.1} parent=1 // pred_check
      _
    $region19: #{tpu_custom_call.1} parent=1 // pred_check_branch
      %63 = sbr.rel (0) target = $region21
    $region20: #{tpu_custom_call.1} parent=1 // pred_region
      %s65 = ssub.s32 1024, 1024
      %66 = vsyncadd [#allocation9], %s65
      %s67 = sshll.u32 [#allocation8], 4
      %s68 = int_to_ptr.vmem [resolvable:$true] %s67
      %73 = dma.hbm_to_vmem [thread:$0]  %s4, 1024, %s68, [#allocation9], 64, 64, 4
    $region21: #{tpu_custom_call.1} parent=1 // pred_fallthru
      _
    // Predicated region
    $region22: #{tpu_custom_call.1} parent=1 // pred_check
      _
    $region23: #{tpu_custom_call.1} parent=1 // pred_check_branch
      %75 = sbr.rel (0) target = $region25
    $region24: #{tpu_custom_call.1} parent=1 // pred_region
      _
    $region25: #{tpu_custom_call.1} parent=1 // pred_fallthru
      _
    // Predicated region
    $region26: #{tpu_custom_call.1} parent=1 // pred_check
      _
    $region27: #{tpu_custom_call.1} parent=1 // pred_check_branch
      %77 = sbr.rel (0) target = $region29
    $region28: #{tpu_custom_call.1} parent=1 // pred_region
      %s79 = ssub.s32 4096, 4096
      %80 = vsyncadd [#allocation9], %s79
      %s81 = sshll.u32 [#allocation10], 4
      %s82 = int_to_ptr.vmem [resolvable:$true] %s81
      %87 = dma.hbm_to_vmem [thread:$0]  %s6, 4096, %s82, [#allocation9], 64, 64, 4
    $region29: #{tpu_custom_call.1} parent=1 // pred_fallthru
      _
    // Predicated region
    $region30: #{tpu_custom_call.1} parent=1 // pred_check
      _
    $region31: #{tpu_custom_call.1} parent=1 // pred_check_branch
      %89 = sbr.rel (0) target = $region33
    $region32: #{tpu_custom_call.1} parent=1 // pred_region
      %s91 = ssub.s32 1024, 1024
      %92 = vsyncadd [#allocation12], %s91
      %s93 = sshll.u32 [#allocation11], 4
      %s94 = int_to_ptr.vmem [resolvable:$true] %s93
      %99 = dma.hbm_to_vmem [thread:$0]  %s7, 1024, %s94, [#allocation12], 64, 64, 4
    $region33: #{tpu_custom_call.1} parent=1 // pred_fallthru
      _
    // Predicated region
    $region34: #{tpu_custom_call.1} parent=1 // pred_check
      _
    $region35: #{tpu_custom_call.1} parent=1 // pred_check_branch
      %101 = sbr.rel (0) target = $region37
    $region36: #{tpu_custom_call.1} parent=1 // pred_region
      _
    $region37: #{tpu_custom_call.1} parent=1 // pred_fallthru
      _
    // Predicated region
    $region38: #{tpu_custom_call.1} parent=1 // pred_check
      _
    $region39: #{tpu_custom_call.1} parent=1 // pred_check_branch
      %103 = sbr.rel (0) target = $region41
    $region40: #{tpu_custom_call.1} parent=1 // pred_region
      %s105 = ssub.s32 1024, 1024
      %106 = vsyncadd [#allocation12], %s105
      %s107 = sshll.u32 [#allocation13], 4
      %s108 = int_to_ptr.vmem [resolvable:$true] %s107
      %113 = dma.hbm_to_vmem [thread:$0]  %s9, 1024, %s108, [#allocation12], 64, 64, 4
    $region41: #{tpu_custom_call.1} parent=1 // pred_fallthru
      _
    // Predicated region
    $region42: #{tpu_custom_call.1} parent=1 // pred_check
      _
    $region43: #{tpu_custom_call.1} parent=1 // pred_check_branch
      %115 = sbr.rel (0) target = $region45
    $region44: #{tpu_custom_call.1} parent=1 // pred_region
      _
    $region45: #{tpu_custom_call.1} parent=1 // pred_fallthru
      _
    // Predicated region
    $region46: #{tpu_custom_call.1} parent=1 // pred_check
      _
    $region47: #{tpu_custom_call.1} parent=1 // pred_check_branch
      %117 = sbr.rel (0) target = $region49
    $region48: #{tpu_custom_call.1} parent=1 // pred_region
      %s119 = ssub.s32 1024, 1024
      %120 = vsyncadd [#allocation15], %s119
      %s121 = sshll.u32 [#allocation14], 4
      %s122 = int_to_ptr.vmem [resolvable:$true] %s121
      %127 = dma.hbm_to_vmem [thread:$0]  %s11, 1024, %s122, [#allocation15], 64, 64, 4
    $region49: #{tpu_custom_call.1} parent=1 // pred_fallthru
      _
    // Predicated region
    $region50: #{tpu_custom_call.1} parent=1 // pred_check
      _
    $region51: #{tpu_custom_call.1} parent=1 // pred_check_branch
      %129 = sbr.rel (0) target = $region53
    $region52: #{tpu_custom_call.1} parent=1 // pred_region
      _
    $region53: #{tpu_custom_call.1} parent=1 // pred_fallthru
      _
    // Predicated region
    $region54: #{tpu_custom_call.1} parent=1 // pred_check
      _
    $region55: #{tpu_custom_call.1} parent=1 // pred_check_branch
      %131 = sbr.rel (0) target = $region57
    $region56: #{tpu_custom_call.1} parent=1 // pred_region
      %132 = dma.done [#allocation3], 512
    $region57: #{tpu_custom_call.1} parent=1 // pred_fallthru
      _
    // Predicated region
    $region58: #{tpu_custom_call.1} parent=1 // pred_check
      _
    $region59: #{tpu_custom_call.1} parent=1 // pred_check_branch
      %134 = sbr.rel (0) target = $region61
    $region60: #{tpu_custom_call.1} parent=1 // pred_region
      %135 = dma.done [#allocation6], 128
    $region61: #{tpu_custom_call.1} parent=1 // pred_fallthru
      _
    // Predicated region
    $region62: #{tpu_custom_call.1} parent=1 // pred_check
      _
    $region63: #{tpu_custom_call.1} parent=1 // pred_check_branch
      %137 = sbr.rel (0) target = $region65
    $region64: #{tpu_custom_call.1} parent=1 // pred_region
      %138 = dma.done [#allocation6], 1024
    $region65: #{tpu_custom_call.1} parent=1 // pred_fallthru
      _
    // Predicated region
    $region66: #{tpu_custom_call.1} parent=1 // pred_check
      _
    $region67: #{tpu_custom_call.1} parent=1 // pred_check_branch
      %140 = sbr.rel (0) target = $region69
    $region68: #{tpu_custom_call.1} parent=1 // pred_region
      %141 = dma.done [#allocation9], 1024
    $region69: #{tpu_custom_call.1} parent=1 // pred_fallthru
      _
    // Predicated region
    $region70: #{tpu_custom_call.1} parent=1 // pred_check
      _
    $region71: #{tpu_custom_call.1} parent=1 // pred_check_branch
      %143 = sbr.rel (0) target = $region73
    $region72: #{tpu_custom_call.1} parent=1 // pred_region
      %144 = dma.done [#allocation9], 4096
    $region73: #{tpu_custom_call.1} parent=1 // pred_fallthru
      _
    // Predicated region
    $region74: #{tpu_custom_call.1} parent=1 // pred_check
      _
    $region75: #{tpu_custom_call.1} parent=1 // pred_check_branch
      %146 = sbr.rel (0) target = $region77
    $region76: #{tpu_custom_call.1} parent=1 // pred_region
      %147 = dma.done [#allocation12], 1024
    $region77: #{tpu_custom_call.1} parent=1 // pred_fallthru
      _
    // Predicated region
    $region78: #{tpu_custom_call.1} parent=1 // pred_check
      _
    $region79: #{tpu_custom_call.1} parent=1 // pred_check_branch
      %149 = sbr.rel (0) target = $region81
    $region80: #{tpu_custom_call.1} parent=1 // pred_region
      %150 = dma.done [#allocation12], 1024
    $region81: #{tpu_custom_call.1} parent=1 // pred_fallthru
      _
    // Predicated region
    $region82: #{tpu_custom_call.1} parent=1 // pred_check
      _
    $region83: #{tpu_custom_call.1} parent=1 // pred_check_branch
      %152 = sbr.rel (0) target = $region85
    $region84: #{tpu_custom_call.1} parent=1 // pred_region
      %153 = dma.done [#allocation15], 1024
    $region85: #{tpu_custom_call.1} parent=1 // pred_fallthru
      _
    %v155 = vld [vmem:[#allocation5] sm:$0xf]
    %v156 = vld [vmem:[#allocation5 + $0x4] sm:$0xf]
    %v157 = vld [vmem:[#allocation7] sm:$0xf]
    %v158 = vld [vmem:[#allocation7 + $0x4] sm:$0xf]
    %v159 = vld [vmem:[#allocation7 + $0x8] sm:$0xf]
    %v160 = vld [vmem:[#allocation7 + $0xc] sm:$0xf]
    %v161 = vld [vmem:[#allocation7 + $0x10] sm:$0xf]
    %v162 = vld [vmem:[#allocation7 + $0x14] sm:$0xf]
    %v163 = vld [vmem:[#allocation7 + $0x18] sm:$0xf]
    %v164 = vld [vmem:[#allocation7 + $0x1c] sm:$0xf]
    %v165 = vld [vmem:[#allocation7 + $0x20] sm:$0xf]
    %v166 = vld [vmem:[#allocation7 + $0x24] sm:$0xf]
    %v167 = vld [vmem:[#allocation7 + $0x28] sm:$0xf]
    %v168 = vld [vmem:[#allocation7 + $0x2c] sm:$0xf]
    %v169 = vld [vmem:[#allocation7 + $0x30] sm:$0xf]
    %v170 = vld [vmem:[#allocation7 + $0x34] sm:$0xf]
    %v171 = vld [vmem:[#allocation7 + $0x38] sm:$0xf]
    %v172 = vld [vmem:[#allocation7 + $0x3c] sm:$0xf]
    %v173 = vld [vmem:[%s3] sm:$0x1]
    %v175 = vlaneseq
    %v176 = vshrl.u32 %v175, 7
    %v177 = vsub.s32 0, %v176
    %v178 = vrot.slane %v173, %v177
    %v182 = vunpack.c.l.b16 %v155
    %v183 = vunpack.c.l.b16 %v156
    %v184 = vpack.c.b16 %v183, %v182
    %v202 = vunpack.c.l.b16 %v157
    %v203 = vunpack.c.l.b16 %v158
    %v204 = vunpack.c.l.b16 %v159
    %v205 = vunpack.c.l.b16 %v160
    %v206 = vunpack.c.l.b16 %v161
    %v207 = vunpack.c.l.b16 %v162
    %v208 = vunpack.c.l.b16 %v163
    %v209 = vunpack.c.l.b16 %v164
    %v210 = vunpack.c.l.b16 %v165
    %v211 = vunpack.c.l.b16 %v166
    %v212 = vunpack.c.l.b16 %v167
    %v213 = vunpack.c.l.b16 %v168
    %v214 = vunpack.c.l.b16 %v169
    %v215 = vunpack.c.l.b16 %v170
    %v216 = vunpack.c.l.b16 %v171
    %v217 = vunpack.c.l.b16 %v172
    %v218 = vpack.c.b16 %v203, %v202
    %v219 = vpack.c.b16 %v205, %v204
    %v220 = vpack.c.b16 %v207, %v206
    %v221 = vpack.c.b16 %v209, %v208
    %v222 = vpack.c.b16 %v211, %v210
    %v223 = vpack.c.b16 %v213, %v212
    %v224 = vpack.c.b16 %v215, %v214
    %v225 = vpack.c.b16 %v217, %v216
    %234 = vmatprep.subr.bf16.mxu0 0
    %235 = vmatpush1.bf16.msra.mxu0 %v218
    %236 = vmatprep.subr.bf16.mxu0 0
    %237 = vmatpush1.bf16.msra.mxu0 %v219
    %238 = vmatprep.subr.bf16.mxu0 0
    %239 = vmatpush1.bf16.msra.mxu0 %v220
    %240 = vmatprep.subr.bf16.mxu0 0
    %241 = vmatpush1.bf16.msra.mxu0 %v221
    %242 = vmatprep.subr.bf16.mxu0 0
    %243 = vmatpush1.bf16.msra.mxu0 %v222
    %244 = vmatprep.subr.bf16.mxu0 0
    %245 = vmatpush1.bf16.msra.mxu0 %v223
    %246 = vmatprep.subr.bf16.mxu0 0
    %247 = vmatpush1.bf16.msra.mxu0 %v224
    %248 = vmatprep.subr.bf16.mxu0 0
    %249 = vmatpush1.bf16.msra.mxu0 %v225
    %250 = vmatprep.subr.bf16.mxu0 0
    %251 = vmatpush1.bf16.msra.mxu0 0
    %252 = vmatprep.subr.bf16.mxu0 0
    %253 = vmatpush1.bf16.msra.mxu0 0
    %254 = vmatprep.subr.bf16.mxu0 0
    %255 = vmatpush1.bf16.msra.mxu0 0
    %256 = vmatprep.subr.bf16.mxu0 0
    %257 = vmatpush1.bf16.msra.mxu0 0
    %258 = vmatprep.subr.bf16.mxu0 0
    %259 = vmatpush1.bf16.msra.mxu0 0
    %260 = vmatprep.subr.bf16.mxu0 0
    %261 = vmatpush1.bf16.msra.mxu0 0
    %262 = vmatprep.subr.bf16.mxu0 0
    %263 = vmatpush1.bf16.msra.mxu0 0
    %264 = vmatprep.subr.bf16.mxu0 0
    %265 = vmatpush1.bf16.msra.mxu0 0
    %266 = vmatprep.mubr.bf16.mxu0 0
    %267 = vmatmul.mubr.bf16.gmra.mrb[0].mxu0 %v184
    %v268 = vpop.f32.mrb[0].mxu0
    %v269 = vadd.f32 %v178, %v268
    %v270 = vpop.f32.mrb[0].mxu0
    %v271 = vpop.f32.mrb[0].mxu0
    %v272 = vadd.f32 %v178, %v271
    %v273 = vpop.f32.mrb[0].mxu0
    %274 = vdwg.mxu0
    %v275 = vmax.f32 %v269, 0.0
    %v276 = vmax.f32 %v272, 0.0
    %v277 = vpack.c.bf16 %v276, %v275
    %v278 = vld [vmem:[#allocation8] sm:$0xf]
    %v279 = vld [vmem:[#allocation8 + $0x4] sm:$0xf]
    %v280 = vld [vmem:[#allocation8 + $0x8] sm:$0xf]
    %v281 = vld [vmem:[#allocation8 + $0xc] sm:$0xf]
    %v282 = vld [vmem:[#allocation8 + $0x10] sm:$0xf]
    %v283 = vld [vmem:[#allocation8 + $0x14] sm:$0xf]
    %v284 = vld [vmem:[#allocation8 + $0x18] sm:$0xf]
    %v285 = vld [vmem:[#allocation8 + $0x1c] sm:$0xf]
    %v286 = vld [vmem:[#allocation8 + $0x20] sm:$0xf]
    %v287 = vld [vmem:[#allocation8 + $0x24] sm:$0xf]
    %v288 = vld [vmem:[#allocation8 + $0x28] sm:$0xf]
    %v289 = vld [vmem:[#allocation8 + $0x2c] sm:$0xf]
    %v290 = vld [vmem:[#allocation8 + $0x30] sm:$0xf]
    %v291 = vld [vmem:[#allocation8 + $0x34] sm:$0xf]
    %v292 = vld [vmem:[#allocation8 + $0x38] sm:$0xf]
    %v293 = vld [vmem:[#allocation8 + $0x3c] sm:$0xf]
    %v294 = vld [vmem:[%s5] sm:$0x1]
    %v296 = vlaneseq
    %v297 = vshrl.u32 %v296, 7
    %v298 = vsub.s32 0, %v297
    %v299 = vrot.slane %v294, %v298
    %v317 = vunpack.c.l.b16 %v278
    %v318 = vunpack.c.l.b16 %v279
    %v319 = vunpack.c.l.b16 %v280
    %v320 = vunpack.c.l.b16 %v281
    %v321 = vunpack.c.l.b16 %v282
    %v322 = vunpack.c.l.b16 %v283
    %v323 = vunpack.c.l.b16 %v284
    %v324 = vunpack.c.l.b16 %v285
    %v325 = vunpack.c.l.b16 %v286
    %v326 = vunpack.c.l.b16 %v287
    %v327 = vunpack.c.l.b16 %v288
    %v328 = vunpack.c.l.b16 %v289
    %v329 = vunpack.c.l.b16 %v290
    %v330 = vunpack.c.l.b16 %v291
    %v331 = vunpack.c.l.b16 %v292
    %v332 = vunpack.c.l.b16 %v293
    %v333 = vpack.c.b16 %v318, %v317
    %v334 = vpack.c.b16 %v320, %v319
    %v335 = vpack.c.b16 %v322, %v321
    %v336 = vpack.c.b16 %v324, %v323
    %v337 = vpack.c.b16 %v326, %v325
    %v338 = vpack.c.b16 %v328, %v327
    %v339 = vpack.c.b16 %v330, %v329
    %v340 = vpack.c.b16 %v332, %v331
    %349 = vmatprep.subr.bf16.mxu0 0
    %350 = vmatpush1.bf16.msra.mxu0 %v333
    %351 = vmatprep.subr.bf16.mxu0 0
    %352 = vmatpush1.bf16.msra.mxu0 %v334
    %353 = vmatprep.subr.bf16.mxu0 0
    %354 = vmatpush1.bf16.msra.mxu0 %v335
    %355 = vmatprep.subr.bf16.mxu0 0
    %356 = vmatpush1.bf16.msra.mxu0 %v336
    %357 = vmatprep.subr.bf16.mxu0 0
    %358 = vmatpush1.bf16.msra.mxu0 %v337
    %359 = vmatprep.subr.bf16.mxu0 0
    %360 = vmatpush1.bf16.msra.mxu0 %v338
    %361 = vmatprep.subr.bf16.mxu0 0
    %362 = vmatpush1.bf16.msra.mxu0 %v339
    %363 = vmatprep.subr.bf16.mxu0 0
    %364 = vmatpush1.bf16.msra.mxu0 %v340
    %365 = vmatprep.subr.bf16.mxu0 0
    %366 = vmatpush1.bf16.msra.mxu0 0
    %367 = vmatprep.subr.bf16.mxu0 0
    %368 = vmatpush1.bf16.msra.mxu0 0
    %369 = vmatprep.subr.bf16.mxu0 0
    %370 = vmatpush1.bf16.msra.mxu0 0
    %371 = vmatprep.subr.bf16.mxu0 0
    %372 = vmatpush1.bf16.msra.mxu0 0
    %373 = vmatprep.subr.bf16.mxu0 0
    %374 = vmatpush1.bf16.msra.mxu0 0
    %375 = vmatprep.subr.bf16.mxu0 0
    %376 = vmatpush1.bf16.msra.mxu0 0
    %377 = vmatprep.subr.bf16.mxu0 0
    %378 = vmatpush1.bf16.msra.mxu0 0
    %379 = vmatprep.subr.bf16.mxu0 0
    %380 = vmatpush1.bf16.msra.mxu0 0
    %381 = vmatprep.mubr.bf16.mxu0 0
    %382 = vmatmul.mubr.bf16.gmra.mrb[0].mxu0 %v277
    %v383 = vpop.f32.mrb[0].mxu0
    %v384 = vadd.f32 %v299, %v383
    %v385 = vpop.f32.mrb[0].mxu0
    %v386 = vpop.f32.mrb[0].mxu0
    %v387 = vadd.f32 %v299, %v386
    %v388 = vpop.f32.mrb[0].mxu0
    %389 = vdwg.mxu0
    %v390 = vmax.f32 %v384, 0.0
    %v391 = vmax.f32 %v387, 0.0
    %v392 = vld [vmem:[#allocation2] sm:$0xff]
    %v393 = vld [vmem:[#allocation2 + $0x8] sm:$0xff]
    %v394 = vld [vmem:[#allocation2 + $0x10] sm:$0xff]
    %v395 = vld [vmem:[#allocation2 + $0x18] sm:$0xff]
    %v396 = vld [vmem:[#allocation10] sm:$0xf]
    %v397 = vld [vmem:[#allocation10 + $0x4] sm:$0xf]
    %v398 = vld [vmem:[#allocation10 + $0x8] sm:$0xf]
    %v399 = vld [vmem:[#allocation10 + $0xc] sm:$0xf]
    %v400 = vld [vmem:[#allocation10 + $0x10] sm:$0xf]
    %v401 = vld [vmem:[#allocation10 + $0x14] sm:$0xf]
    %v402 = vld [vmem:[#allocation10 + $0x18] sm:$0xf]
    %v403 = vld [vmem:[#allocation10 + $0x1c] sm:$0xf]
    %v404 = vld [vmem:[#allocation10 + $0x20] sm:$0xf]
    %v405 = vld [vmem:[#allocation10 + $0x24] sm:$0xf]
    %v406 = vld [vmem:[#allocation10 + $0x28] sm:$0xf]
    %v407 = vld [vmem:[#allocation10 + $0x2c] sm:$0xf]
    %v408 = vld [vmem:[#allocation10 + $0x30] sm:$0xf]
    %v409 = vld [vmem:[#allocation10 + $0x34] sm:$0xf]
    %v410 = vld [vmem:[#allocation10 + $0x38] sm:$0xf]
    %v411 = vld [vmem:[#allocation10 + $0x3c] sm:$0xf]
    %v412 = vld [vmem:[#allocation10 + $0x40] sm:$0xf]
    %v413 = vld [vmem:[#allocation10 + $0x44] sm:$0xf]
    %v414 = vld [vmem:[#allocation10 + $0x48] sm:$0xf]
    %v415 = vld [vmem:[#allocation10 + $0x4c] sm:$0xf]
    %v416 = vld [vmem:[#allocation10 + $0x50] sm:$0xf]
    %v417 = vld [vmem:[#allocation10 + $0x54] sm:$0xf]
    %v418 = vld [vmem:[#allocation10 + $0x58] sm:$0xf]
    %v419 = vld [vmem:[#allocation10 + $0x5c] sm:$0xf]
    %v420 = vld [vmem:[#allocation10 + $0x60] sm:$0xf]
    %v421 = vld [vmem:[#allocation10 + $0x64] sm:$0xf]
    %v422 = vld [vmem:[#allocation10 + $0x68] sm:$0xf]
    %v423 = vld [vmem:[#allocation10 + $0x6c] sm:$0xf]
    %v424 = vld [vmem:[#allocation10 + $0x70] sm:$0xf]
    %v425 = vld [vmem:[#allocation10 + $0x74] sm:$0xf]
    %v426 = vld [vmem:[#allocation10 + $0x78] sm:$0xf]
    %v427 = vld [vmem:[#allocation10 + $0x7c] sm:$0xf]
    %v428 = vld [vmem:[#allocation10 + $0x80] sm:$0xf]
    %v429 = vld [vmem:[#allocation10 + $0x84] sm:$0xf]
    %v430 = vld [vmem:[#allocation10 + $0x88] sm:$0xf]
    %v431 = vld [vmem:[#allocation10 + $0x8c] sm:$0xf]
    %v432 = vld [vmem:[#allocation10 + $0x90] sm:$0xf]
    %v433 = vld [vmem:[#allocation10 + $0x94] sm:$0xf]
    %v434 = vld [vmem:[#allocation10 + $0x98] sm:$0xf]
    %v435 = vld [vmem:[#allocation10 + $0x9c] sm:$0xf]
    %v436 = vld [vmem:[#allocation10 + $0xa0] sm:$0xf]
    %v437 = vld [vmem:[#allocation10 + $0xa4] sm:$0xf]
    %v438 = vld [vmem:[#allocation10 + $0xa8] sm:$0xf]
    %v439 = vld [vmem:[#allocation10 + $0xac] sm:$0xf]
    %v440 = vld [vmem:[#allocation10 + $0xb0] sm:$0xf]
    %v441 = vld [vmem:[#allocation10 + $0xb4] sm:$0xf]
    %v442 = vld [vmem:[#allocation10 + $0xb8] sm:$0xf]
    %v443 = vld [vmem:[#allocation10 + $0xbc] sm:$0xf]
    %v444 = vld [vmem:[#allocation10 + $0xc0] sm:$0xf]
    %v445 = vld [vmem:[#allocation10 + $0xc4] sm:$0xf]
    %v446 = vld [vmem:[#allocation10 + $0xc8] sm:$0xf]
    %v447 = vld [vmem:[#allocation10 + $0xcc] sm:$0xf]
    %v448 = vld [vmem:[#allocation10 + $0xd0] sm:$0xf]
    %v449 = vld [vmem:[#allocation10 + $0xd4] sm:$0xf]
    %v450 = vld [vmem:[#allocation10 + $0xd8] sm:$0xf]
    %v451 = vld [vmem:[#allocation10 + $0xdc] sm:$0xf]
    %v452 = vld [vmem:[#allocation10 + $0xe0] sm:$0xf]
    %v453 = vld [vmem:[#allocation10 + $0xe4] sm:$0xf]
    %v454 = vld [vmem:[#allocation10 + $0xe8] sm:$0xf]
    %v455 = vld [vmem:[#allocation10 + $0xec] sm:$0xf]
    %v456 = vld [vmem:[#allocation10 + $0xf0] sm:$0xf]
    %v457 = vld [vmem:[#allocation10 + $0xf4] sm:$0xf]
    %v458 = vld [vmem:[#allocation10 + $0xf8] sm:$0xf]
    %v459 = vld [vmem:[#allocation10 + $0xfc] sm:$0xf]
    %v460 = vpack.c.bf16 %v391, %v390
    %v461 = vld [vmem:[#allocation11] sm:$0xf]
    %v462 = vld [vmem:[#allocation11 + $0x4] sm:$0xf]
    %v463 = vld [vmem:[#allocation11 + $0x8] sm:$0xf]
    %v464 = vld [vmem:[#allocation11 + $0xc] sm:$0xf]
    %v465 = vld [vmem:[#allocation11 + $0x10] sm:$0xf]
    %v466 = vld [vmem:[#allocation11 + $0x14] sm:$0xf]
    %v467 = vld [vmem:[#allocation11 + $0x18] sm:$0xf]
    %v468 = vld [vmem:[#allocation11 + $0x1c] sm:$0xf]
    %v469 = vld [vmem:[#allocation11 + $0x20] sm:$0xf]
    %v470 = vld [vmem:[#allocation11 + $0x24] sm:$0xf]
    %v471 = vld [vmem:[#allocation11 + $0x28] sm:$0xf]
    %v472 = vld [vmem:[#allocation11 + $0x2c] sm:$0xf]
    %v473 = vld [vmem:[#allocation11 + $0x30] sm:$0xf]
    %v474 = vld [vmem:[#allocation11 + $0x34] sm:$0xf]
    %v475 = vld [vmem:[#allocation11 + $0x38] sm:$0xf]
    %v476 = vld [vmem:[#allocation11 + $0x3c] sm:$0xf]
    %v493 = vunpack.c.l.b16 %v461
    %v494 = vunpack.c.l.b16 %v462
    %v495 = vunpack.c.l.b16 %v463
    %v496 = vunpack.c.l.b16 %v464
    %v497 = vunpack.c.l.b16 %v465
    %v498 = vunpack.c.l.b16 %v466
    %v499 = vunpack.c.l.b16 %v467
    %v500 = vunpack.c.l.b16 %v468
    %v501 = vunpack.c.l.b16 %v469
    %v502 = vunpack.c.l.b16 %v470
    %v503 = vunpack.c.l.b16 %v471
    %v504 = vunpack.c.l.b16 %v472
    %v505 = vunpack.c.l.b16 %v473
    %v506 = vunpack.c.l.b16 %v474
    %v507 = vunpack.c.l.b16 %v475
    %v508 = vunpack.c.l.b16 %v476
    %v509 = vpack.c.b16 %v494, %v493
    %v510 = vpack.c.b16 %v496, %v495
    %v511 = vpack.c.b16 %v498, %v497
    %v512 = vpack.c.b16 %v500, %v499
    %v513 = vpack.c.b16 %v502, %v501
    %v514 = vpack.c.b16 %v504, %v503
    %v515 = vpack.c.b16 %v506, %v505
    %v516 = vpack.c.b16 %v508, %v507
    %525 = vmatprep.subr.bf16.mxu0 0
    %526 = vmatpush1.bf16.msra.mxu0 %v509
    %527 = vmatprep.subr.bf16.mxu0 0
    %528 = vmatpush1.bf16.msra.mxu0 %v510
    %529 = vmatprep.subr.bf16.mxu0 0
    %530 = vmatpush1.bf16.msra.mxu0 %v511
    %531 = vmatprep.subr.bf16.mxu0 0
    %532 = vmatpush1.bf16.msra.mxu0 %v512
    %533 = vmatprep.subr.bf16.mxu0 0
    %534 = vmatpush1.bf16.msra.mxu0 %v513
    %535 = vmatprep.subr.bf16.mxu0 0
    %536 = vmatpush1.bf16.msra.mxu0 %v514
    %537 = vmatprep.subr.bf16.mxu0 0
    %538 = vmatpush1.bf16.msra.mxu0 %v515
    %539 = vmatprep.subr.bf16.mxu0 0
    %540 = vmatpush1.bf16.msra.mxu0 %v516
    %541 = vmatprep.subr.bf16.mxu0 0
    %542 = vmatpush1.bf16.msra.mxu0 0
    %543 = vmatprep.subr.bf16.mxu0 0
    %544 = vmatpush1.bf16.msra.mxu0 0
    %545 = vmatprep.subr.bf16.mxu0 0
    %546 = vmatpush1.bf16.msra.mxu0 0
    %547 = vmatprep.subr.bf16.mxu0 0
    %548 = vmatpush1.bf16.msra.mxu0 0
    %549 = vmatprep.subr.bf16.mxu0 0
    %550 = vmatpush1.bf16.msra.mxu0 0
    %551 = vmatprep.subr.bf16.mxu0 0
    %552 = vmatpush1.bf16.msra.mxu0 0
    %553 = vmatprep.subr.bf16.mxu0 0
    %554 = vmatpush1.bf16.msra.mxu0 0
    %555 = vmatprep.subr.bf16.mxu0 0
    %556 = vmatpush1.bf16.msra.mxu0 0
    %557 = vmatprep.mubr.bf16.mxu0 0
    %558 = vmatmul.mubr.bf16.gmra.mrb[0].mxu0 %v460
    %v559 = vpop.f32.mrb[0].mxu0
    %v560 = vadd.f32 0.0, %v559
    %v561 = vpop.f32.mrb[0].mxu0
    %v562 = vpop.f32.mrb[0].mxu0
    %v563 = vadd.f32 0.0, %v562
    %v564 = vpop.f32.mrb[0].mxu0
    %565 = vdwg.mxu0
    %v570 = vunpack.c.l.b16 %v392
    %v571 = vunpack.c.h.b16 %v392
    %v572 = vunpack.c.l.b16 %v393
    %v573 = vunpack.c.h.b16 %v393
    %v574 = vunpack.c.l.b16 %v394
    %v575 = vunpack.c.h.b16 %v394
    %v576 = vunpack.c.l.b16 %v395
    %v577 = vunpack.c.h.b16 %v395
    %v578 = vpack.c.b16 %v574, %v570
    %v579 = vpack.c.b16 %v575, %v571
    %v580 = vpack.c.b16 %v576, %v572
    %v581 = vpack.c.b16 %v577, %v573
    %v650 = vunpack.c.l.b16 %v396
    %v651 = vunpack.c.l.b16 %v397
    %v652 = vunpack.c.l.b16 %v398
    %v653 = vunpack.c.l.b16 %v399
    %v654 = vunpack.c.l.b16 %v400
    %v655 = vunpack.c.l.b16 %v401
    %v656 = vunpack.c.l.b16 %v402
    %v657 = vunpack.c.l.b16 %v403
    %v658 = vunpack.c.l.b16 %v404
    %v659 = vunpack.c.l.b16 %v405
    %v660 = vunpack.c.l.b16 %v406
    %v661 = vunpack.c.l.b16 %v407
    %v662 = vunpack.c.l.b16 %v408
    %v663 = vunpack.c.l.b16 %v409
    %v664 = vunpack.c.l.b16 %v410
    %v665 = vunpack.c.l.b16 %v411
    %v666 = vunpack.c.l.b16 %v412
    %v667 = vunpack.c.l.b16 %v413
    %v668 = vunpack.c.l.b16 %v414
    %v669 = vunpack.c.l.b16 %v415
    %v670 = vunpack.c.l.b16 %v416
    %v671 = vunpack.c.l.b16 %v417
    %v672 = vunpack.c.l.b16 %v418
    %v673 = vunpack.c.l.b16 %v419
    %v674 = vunpack.c.l.b16 %v420
    %v675 = vunpack.c.l.b16 %v421
    %v676 = vunpack.c.l.b16 %v422
    %v677 = vunpack.c.l.b16 %v423
    %v678 = vunpack.c.l.b16 %v424
    %v679 = vunpack.c.l.b16 %v425
    %v680 = vunpack.c.l.b16 %v426
    %v681 = vunpack.c.l.b16 %v427
    %v682 = vunpack.c.l.b16 %v428
    %v683 = vunpack.c.l.b16 %v429
    %v684 = vunpack.c.l.b16 %v430
    %v685 = vunpack.c.l.b16 %v431
    %v686 = vunpack.c.l.b16 %v432
    %v687 = vunpack.c.l.b16 %v433
    %v688 = vunpack.c.l.b16 %v434
    %v689 = vunpack.c.l.b16 %v435
    %v690 = vunpack.c.l.b16 %v436
    %v691 = vunpack.c.l.b16 %v437
    %v692 = vunpack.c.l.b16 %v438
    %v693 = vunpack.c.l.b16 %v439
    %v694 = vunpack.c.l.b16 %v440
    %v695 = vunpack.c.l.b16 %v441
    %v696 = vunpack.c.l.b16 %v442
    %v697 = vunpack.c.l.b16 %v443
    %v698 = vunpack.c.l.b16 %v444
    %v699 = vunpack.c.l.b16 %v445
    %v700 = vunpack.c.l.b16 %v446
    %v701 = vunpack.c.l.b16 %v447
    %v702 = vunpack.c.l.b16 %v448
    %v703 = vunpack.c.l.b16 %v449
    %v704 = vunpack.c.l.b16 %v450
    %v705 = vunpack.c.l.b16 %v451
    %v706 = vunpack.c.l.b16 %v452
    %v707 = vunpack.c.l.b16 %v453
    %v708 = vunpack.c.l.b16 %v454
    %v709 = vunpack.c.l.b16 %v455
    %v710 = vunpack.c.l.b16 %v456
    %v711 = vunpack.c.l.b16 %v457
    %v712 = vunpack.c.l.b16 %v458
    %v713 = vunpack.c.l.b16 %v459
    %v714 = vpack.c.b16 %v651, %v650
    %v715 = vpack.c.b16 %v653, %v652
    %v716 = vpack.c.b16 %v655, %v654
    %v717 = vpack.c.b16 %v657, %v656
    %v718 = vpack.c.b16 %v659, %v658
    %v719 = vpack.c.b16 %v661, %v660
    %v720 = vpack.c.b16 %v663, %v662
    %v721 = vpack.c.b16 %v665, %v664
    %v722 = vpack.c.b16 %v667, %v666
    %v723 = vpack.c.b16 %v669, %v668
    %v724 = vpack.c.b16 %v671, %v670
    %v725 = vpack.c.b16 %v673, %v672
    %v726 = vpack.c.b16 %v675, %v674
    %v727 = vpack.c.b16 %v677, %v676
    %v728 = vpack.c.b16 %v679, %v678
    %v729 = vpack.c.b16 %v681, %v680
    %v730 = vpack.c.b16 %v683, %v682
    %v731 = vpack.c.b16 %v685, %v684
    %v732 = vpack.c.b16 %v687, %v686
    %v733 = vpack.c.b16 %v689, %v688
    %v734 = vpack.c.b16 %v691, %v690
    %v735 = vpack.c.b16 %v693, %v692
    %v736 = vpack.c.b16 %v695, %v694
    %v737 = vpack.c.b16 %v697, %v696
    %v738 = vpack.c.b16 %v699, %v698
    %v739 = vpack.c.b16 %v701, %v700
    %v740 = vpack.c.b16 %v703, %v702
    %v741 = vpack.c.b16 %v705, %v704
    %v742 = vpack.c.b16 %v707, %v706
    %v743 = vpack.c.b16 %v709, %v708
    %v744 = vpack.c.b16 %v711, %v710
    %v745 = vpack.c.b16 %v713, %v712
    %778 = vmatprep.subr.bf16.mxu0 0
    %779 = vmatpush1.bf16.msra.mxu0 %v714
    %780 = vmatprep.subr.bf16.mxu0 0
    %781 = vmatpush1.bf16.msra.mxu0 %v715
    %782 = vmatprep.subr.bf16.mxu0 0
    %783 = vmatpush1.bf16.msra.mxu0 %v716
    %784 = vmatprep.subr.bf16.mxu0 0
    %785 = vmatpush1.bf16.msra.mxu0 %v717
    %786 = vmatprep.subr.bf16.mxu0 0
    %787 = vmatpush1.bf16.msra.mxu0 %v718
    %788 = vmatprep.subr.bf16.mxu0 0
    %789 = vmatpush1.bf16.msra.mxu0 %v719
    %790 = vmatprep.subr.bf16.mxu0 0
    %791 = vmatpush1.bf16.msra.mxu0 %v720
    %792 = vmatprep.subr.bf16.mxu0 0
    %793 = vmatpush1.bf16.msra.mxu0 %v721
    %794 = vmatprep.subr.bf16.mxu0 0
    %795 = vmatpush1.bf16.msra.mxu0 %v722
    %796 = vmatprep.subr.bf16.mxu0 0
    %797 = vmatpush1.bf16.msra.mxu0 %v723
    %798 = vmatprep.subr.bf16.mxu0 0
    %799 = vmatpush1.bf16.msra.mxu0 %v724
    %800 = vmatprep.subr.bf16.mxu0 0
    %801 = vmatpush1.bf16.msra.mxu0 %v725
    %802 = vmatprep.subr.bf16.mxu0 0
    %803 = vmatpush1.bf16.msra.mxu0 %v726
    %804 = vmatprep.subr.bf16.mxu0 0
    %805 = vmatpush1.bf16.msra.mxu0 %v727
    %806 = vmatprep.subr.bf16.mxu0 0
    %807 = vmatpush1.bf16.msra.mxu0 %v728
    %808 = vmatprep.subr.bf16.mxu0 0
    %809 = vmatpush1.bf16.msra.mxu0 %v729
    %810 = vmatprep.mubr.bf16.mxu0 %v579
    %811 = vmatmul.mubr.bf16.gmra.mrb[0].mxu0 %v578
    %v812 = vpop.f32.mrb[0].mxu0
    %v813 = vadd.f32 %v560, %v812
    %v814 = vpop.f32.mrb[0].mxu0
    %v815 = vpop.f32.mrb[0].mxu0
    %v816 = vadd.f32 %v563, %v815
    %v817 = vpop.f32.mrb[0].mxu0
    %818 = vdwg.mxu0
    %819 = vmatprep.subr.bf16.mxu0 0
    %820 = vmatpush1.bf16.msra.mxu0 %v730
    %821 = vmatprep.subr.bf16.mxu0 0
    %822 = vmatpush1.bf16.msra.mxu0 %v731
    %823 = vmatprep.subr.bf16.mxu0 0
    %824 = vmatpush1.bf16.msra.mxu0 %v732
    %825 = vmatprep.subr.bf16.mxu0 0
    %826 = vmatpush1.bf16.msra.mxu0 %v733
    %827 = vmatprep.subr.bf16.mxu0 0
    %828 = vmatpush1.bf16.msra.mxu0 %v734
    %829 = vmatprep.subr.bf16.mxu0 0
    %830 = vmatpush1.bf16.msra.mxu0 %v735
    %831 = vmatprep.subr.bf16.mxu0 0
    %832 = vmatpush1.bf16.msra.mxu0 %v736
    %833 = vmatprep.subr.bf16.mxu0 0
    %834 = vmatpush1.bf16.msra.mxu0 %v737
    %835 = vmatprep.subr.bf16.mxu0 0
    %836 = vmatpush1.bf16.msra.mxu0 %v738
    %837 = vmatprep.subr.bf16.mxu0 0
    %838 = vmatpush1.bf16.msra.mxu0 %v739
    %839 = vmatprep.subr.bf16.mxu0 0
    %840 = vmatpush1.bf16.msra.mxu0 %v740
    %841 = vmatprep.subr.bf16.mxu0 0
    %842 = vmatpush1.bf16.msra.mxu0 %v741
    %843 = vmatprep.subr.bf16.mxu0 0
    %844 = vmatpush1.bf16.msra.mxu0 %v742
    %845 = vmatprep.subr.bf16.mxu0 0
    %846 = vmatpush1.bf16.msra.mxu0 %v743
    %847 = vmatprep.subr.bf16.mxu0 0
    %848 = vmatpush1.bf16.msra.mxu0 %v744
    %849 = vmatprep.subr.bf16.mxu0 0
    %850 = vmatpush1.bf16.msra.mxu0 %v745
    %851 = vmatprep.mubr.bf16.mxu0 %v581
    %852 = vmatmul.mubr.bf16.gmra.mrb[0].mxu0 %v580
    %v853 = vpop.f32.mrb[0].mxu0
    %v854 = vadd.f32 %v813, %v853
    %v855 = vpop.f32.mrb[0].mxu0
    %v856 = vpop.f32.mrb[0].mxu0
    %v857 = vadd.f32 %v816, %v856
    %v858 = vpop.f32.mrb[0].mxu0
    %859 = vdwg.mxu0
    %v860 = vld [vmem:[%s8] sm:$0x1]
    %v862 = vlaneseq
    %v863 = vshrl.u32 %v862, 7
    %v864 = vsub.s32 0, %v863
    %v865 = vrot.slane %v860, %v864
    %v867 = vadd.f32 %v854, %v865
    %v868 = vadd.f32 %v857, %v865
    %v869 = vmax.f32 %v867, 0.0
    %v870 = vmax.f32 %v868, 0.0
    %v871 = vpack.c.bf16 %v870, %v869
    %v872 = vld [vmem:[#allocation13] sm:$0xf]
    %v873 = vld [vmem:[#allocation13 + $0x4] sm:$0xf]
    %v874 = vld [vmem:[#allocation13 + $0x8] sm:$0xf]
    %v875 = vld [vmem:[#allocation13 + $0xc] sm:$0xf]
    %v876 = vld [vmem:[#allocation13 + $0x10] sm:$0xf]
    %v877 = vld [vmem:[#allocation13 + $0x14] sm:$0xf]
    %v878 = vld [vmem:[#allocation13 + $0x18] sm:$0xf]
    %v879 = vld [vmem:[#allocation13 + $0x1c] sm:$0xf]
    %v880 = vld [vmem:[#allocation13 + $0x20] sm:$0xf]
    %v881 = vld [vmem:[#allocation13 + $0x24] sm:$0xf]
    %v882 = vld [vmem:[#allocation13 + $0x28] sm:$0xf]
    %v883 = vld [vmem:[#allocation13 + $0x2c] sm:$0xf]
    %v884 = vld [vmem:[#allocation13 + $0x30] sm:$0xf]
    %v885 = vld [vmem:[#allocation13 + $0x34] sm:$0xf]
    %v886 = vld [vmem:[#allocation13 + $0x38] sm:$0xf]
    %v887 = vld [vmem:[#allocation13 + $0x3c] sm:$0xf]
    %v888 = vld [vmem:[%s10] sm:$0x1]
    %v890 = vlaneseq
    %v891 = vshrl.u32 %v890, 7
    %v892 = vsub.s32 0, %v891
    %v893 = vrot.slane %v888, %v892
    %v911 = vunpack.c.l.b16 %v872
    %v912 = vunpack.c.l.b16 %v873
    %v913 = vunpack.c.l.b16 %v874
    %v914 = vunpack.c.l.b16 %v875
    %v915 = vunpack.c.l.b16 %v876
    %v916 = vunpack.c.l.b16 %v877
    %v917 = vunpack.c.l.b16 %v878
    %v918 = vunpack.c.l.b16 %v879
    %v919 = vunpack.c.l.b16 %v880
    %v920 = vunpack.c.l.b16 %v881
    %v921 = vunpack.c.l.b16 %v882
    %v922 = vunpack.c.l.b16 %v883
    %v923 = vunpack.c.l.b16 %v884
    %v924 = vunpack.c.l.b16 %v885
    %v925 = vunpack.c.l.b16 %v886
    %v926 = vunpack.c.l.b16 %v887
    %v927 = vpack.c.b16 %v912, %v911
    %v928 = vpack.c.b16 %v914, %v913
    %v929 = vpack.c.b16 %v916, %v915
    %v930 = vpack.c.b16 %v918, %v917
    %v931 = vpack.c.b16 %v920, %v919
    %v932 = vpack.c.b16 %v922, %v921
    %v933 = vpack.c.b16 %v924, %v923
    %v934 = vpack.c.b16 %v926, %v925
    %943 = vmatprep.subr.bf16.mxu0 0
    %944 = vmatpush1.bf16.msra.mxu0 %v927
    %945 = vmatprep.subr.bf16.mxu0 0
    %946 = vmatpush1.bf16.msra.mxu0 %v928
    %947 = vmatprep.subr.bf16.mxu0 0
    %948 = vmatpush1.bf16.msra.mxu0 %v929
    %949 = vmatprep.subr.bf16.mxu0 0
    %950 = vmatpush1.bf16.msra.mxu0 %v930
    %951 = vmatprep.subr.bf16.mxu0 0
    %952 = vmatpush1.bf16.msra.mxu0 %v931
    %953 = vmatprep.subr.bf16.mxu0 0
    %954 = vmatpush1.bf16.msra.mxu0 %v932
    %955 = vmatprep.subr.bf16.mxu0 0
    %956 = vmatpush1.bf16.msra.mxu0 %v933
    %957 = vmatprep.subr.bf16.mxu0 0
    %958 = vmatpush1.bf16.msra.mxu0 %v934
    %959 = vmatprep.subr.bf16.mxu0 0
    %960 = vmatpush1.bf16.msra.mxu0 0
    %961 = vmatprep.subr.bf16.mxu0 0
    %962 = vmatpush1.bf16.msra.mxu0 0
    %963 = vmatprep.subr.bf16.mxu0 0
    %964 = vmatpush1.bf16.msra.mxu0 0
    %965 = vmatprep.subr.bf16.mxu0 0
    %966 = vmatpush1.bf16.msra.mxu0 0
    %967 = vmatprep.subr.bf16.mxu0 0
    %968 = vmatpush1.bf16.msra.mxu0 0
    %969 = vmatprep.subr.bf16.mxu0 0
    %970 = vmatpush1.bf16.msra.mxu0 0
    %971 = vmatprep.subr.bf16.mxu0 0
    %972 = vmatpush1.bf16.msra.mxu0 0
    %973 = vmatprep.subr.bf16.mxu0 0
    %974 = vmatpush1.bf16.msra.mxu0 0
    %975 = vmatprep.mubr.bf16.mxu0 0
    %976 = vmatmul.mubr.bf16.gmra.mrb[0].mxu0 %v871
    %v977 = vpop.f32.mrb[0].mxu0
    %v978 = vadd.f32 %v893, %v977
    %v979 = vpop.f32.mrb[0].mxu0
    %v980 = vpop.f32.mrb[0].mxu0
    %v981 = vadd.f32 %v893, %v980
    %v982 = vpop.f32.mrb[0].mxu0
    %983 = vdwg.mxu0
    %v984 = vmax.f32 %v978, 0.0
    %v985 = vmax.f32 %v981, 0.0
    %v986 = vpack.c.bf16 %v985, %v984
    %v987 = vld [vmem:[#allocation14] sm:$0xf]
    %v988 = vld [vmem:[#allocation14 + $0x4] sm:$0xf]
    %v989 = vld [vmem:[#allocation14 + $0x8] sm:$0xf]
    %v990 = vld [vmem:[#allocation14 + $0xc] sm:$0xf]
    %v991 = vld [vmem:[#allocation14 + $0x10] sm:$0xf]
    %v992 = vld [vmem:[#allocation14 + $0x14] sm:$0xf]
    %v993 = vld [vmem:[#allocation14 + $0x18] sm:$0xf]
    %v994 = vld [vmem:[#allocation14 + $0x1c] sm:$0xf]
    %v995 = vld [vmem:[#allocation14 + $0x20] sm:$0xf]
    %v996 = vld [vmem:[#allocation14 + $0x24] sm:$0xf]
    %v997 = vld [vmem:[#allocation14 + $0x28] sm:$0xf]
    %v998 = vld [vmem:[#allocation14 + $0x2c] sm:$0xf]
    %v999 = vld [vmem:[#allocation14 + $0x30] sm:$0xf]
    %v1000 = vld [vmem:[#allocation14 + $0x34] sm:$0xf]
    %v1001 = vld [vmem:[#allocation14 + $0x38] sm:$0xf]
    %v1002 = vld [vmem:[#allocation14 + $0x3c] sm:$0xf]
    %v1003 = vld [vmem:[%s12] sm:$0x1]
    %v1005 = vlaneseq
    %v1006 = vshrl.u32 %v1005, 7
    %v1007 = vsub.s32 0, %v1006
    %v1008 = vrot.slane %v1003, %v1007
    %v1026 = vunpack.c.l.b16 %v987
    %v1027 = vunpack.c.l.b16 %v988
    %v1028 = vunpack.c.l.b16 %v989
    %v1029 = vunpack.c.l.b16 %v990
    %v1030 = vunpack.c.l.b16 %v991
    %v1031 = vunpack.c.l.b16 %v992
    %v1032 = vunpack.c.l.b16 %v993
    %v1033 = vunpack.c.l.b16 %v994
    %v1034 = vunpack.c.l.b16 %v995
    %v1035 = vunpack.c.l.b16 %v996
    %v1036 = vunpack.c.l.b16 %v997
    %v1037 = vunpack.c.l.b16 %v998
    %v1038 = vunpack.c.l.b16 %v999
    %v1039 = vunpack.c.l.b16 %v1000
    %v1040 = vunpack.c.l.b16 %v1001
    %v1041 = vunpack.c.l.b16 %v1002
    %v1042 = vpack.c.b16 %v1027, %v1026
    %v1043 = vpack.c.b16 %v1029, %v1028
    %v1044 = vpack.c.b16 %v1031, %v1030
    %v1045 = vpack.c.b16 %v1033, %v1032
    %v1046 = vpack.c.b16 %v1035, %v1034
    %v1047 = vpack.c.b16 %v1037, %v1036
    %v1048 = vpack.c.b16 %v1039, %v1038
    %v1049 = vpack.c.b16 %v1041, %v1040
    %1058 = vmatprep.subr.bf16.mxu0 0
    %1059 = vmatpush1.bf16.msra.mxu0 %v1042
    %1060 = vmatprep.subr.bf16.mxu0 0
    %1061 = vmatpush1.bf16.msra.mxu0 %v1043
    %1062 = vmatprep.subr.bf16.mxu0 0
    %1063 = vmatpush1.bf16.msra.mxu0 %v1044
    %1064 = vmatprep.subr.bf16.mxu0 0
    %1065 = vmatpush1.bf16.msra.mxu0 %v1045
    %1066 = vmatprep.subr.bf16.mxu0 0
    %1067 = vmatpush1.bf16.msra.mxu0 %v1046
    %1068 = vmatprep.subr.bf16.mxu0 0
    %1069 = vmatpush1.bf16.msra.mxu0 %v1047
    %1070 = vmatprep.subr.bf16.mxu0 0
    %1071 = vmatpush1.bf16.msra.mxu0 %v1048
    %1072 = vmatprep.subr.bf16.mxu0 0
    %1073 = vmatpush1.bf16.msra.mxu0 %v1049
    %1074 = vmatprep.subr.bf16.mxu0 0
    %1075 = vmatpush1.bf16.msra.mxu0 0
    %1076 = vmatprep.subr.bf16.mxu0 0
    %1077 = vmatpush1.bf16.msra.mxu0 0
    %1078 = vmatprep.subr.bf16.mxu0 0
    %1079 = vmatpush1.bf16.msra.mxu0 0
    %1080 = vmatprep.subr.bf16.mxu0 0
    %1081 = vmatpush1.bf16.msra.mxu0 0
    %1082 = vmatprep.subr.bf16.mxu0 0
    %1083 = vmatpush1.bf16.msra.mxu0 0
    %1084 = vmatprep.subr.bf16.mxu0 0
    %1085 = vmatpush1.bf16.msra.mxu0 0
    %1086 = vmatprep.subr.bf16.mxu0 0
    %1087 = vmatpush1.bf16.msra.mxu0 0
    %1088 = vmatprep.subr.bf16.mxu0 0
    %1089 = vmatpush1.bf16.msra.mxu0 0
    %1090 = vmatprep.mubr.bf16.mxu0 0
    %1091 = vmatmul.mubr.bf16.gmra.mrb[0].mxu0 %v986
    %v1092 = vpop.f32.mrb[0].mxu0
    %v1093 = vadd.f32 %v1008, %v1092
    %v1094 = vpop.f32.mrb[0].mxu0
    %v1095 = vpop.f32.mrb[0].mxu0
    %v1096 = vadd.f32 %v1008, %v1095
    %v1097 = vpop.f32.mrb[0].mxu0
    %1098 = vdwg.mxu0
    %1099 = vst [vmem:[#allocation16] sm:$0xff] %v1093
    %1100 = vst [vmem:[#allocation16 + $0x8] sm:$0xff] %v1096
    // Predicated region
    $region86: #{tpu_custom_call.1} parent=1 // pred_check
      _
    $region87: #{tpu_custom_call.1} parent=1 // pred_check_branch
      %1102 = sbr.rel (0) target = $region89
    $region88: #{tpu_custom_call.1} parent=1 // pred_region
      %s1104 = ssub.s32 256, 256
      %1105 = vsyncadd [#allocation4], %s1104
      %s1106 = sshll.u32 [#allocation16], 4
      %s1107 = int_to_ptr.vmem [resolvable:$true] %s1106
      %1112 = dma.vmem_to_hbm [thread:$0]  %s1107, 256, %s13, [#allocation4], 128, 128, 8
    $region89: #{tpu_custom_call.1} parent=1 // pred_fallthru
      _
    // Predicated region
    $region90: #{tpu_custom_call.1} parent=1 // pred_check
      _
    $region91: #{tpu_custom_call.1} parent=1 // pred_check_branch
      %1114 = sbr.rel (0) target = $region93
    $region92: #{tpu_custom_call.1} parent=1 // pred_region
      %1115 = dma.done [#allocation4], 256
    $region93: #{tpu_custom_call.1} parent=1 // pred_fallthru
      _
    %1116 = vsyncpa [#allocation3], 1
    %1117 = vsyncpa [#allocation6], 1
    %1118 = vsyncpa [#allocation9], 1
    %1119 = vsyncpa [#allocation12], 1
    %1120 = vsyncpa [#allocation15], 1
    %1121 = vsyncpa [#allocation4], 1

// kernel: tpu_custom_call.1
$region0: #{tpu_custom_call.1}
  #allocation0 [shape = 'u32[]', space=smem, size = 0x4, offset = 0x4, fixed_abs, tag = 'smem constant byte address 0x4 - core index']
  #allocation1 [shape = 'u32[144,128]{1,0:T(1,128)}', space=vmem, size = 0x12000, scoped, tag = 'internal scratch']
  %s0 = inlined_call_operand.hbm [shape: bf16[16,512], index: 0, kind: input, shape index: {}]
  %s1 = inlined_call_operand.hbm [shape: bf16[16,128], index: 1, kind: input, shape index: {}]
  %s2 = inlined_call_operand.hbm [shape: bf16[128,128], index: 2, kind: input, shape index: {}]
  %s3 = inlined_call_operand.vmem [shape: f32[1,128], index: 3, kind: input, shape index: {}]
  %s4 = inlined_call_operand.hbm [shape: bf16[128,128], index: 4, kind: input, shape index: {}]
  %s5 = inlined_call_operand.vmem [shape: f32[1,128], index: 5, kind: input, shape index: {}]
  %s6 = inlined_call_operand.hbm [shape: bf16[512,128], index: 6, kind: input, shape index: {}]
  %s7 = inlined_call_operand.hbm [shape: bf16[128,128], index: 7, kind: input, shape index: {}]
  %s8 = inlined_call_operand.vmem [shape: f32[1,128], index: 8, kind: input, shape index: {}]
  %s9 = inlined_call_operand.hbm [shape: bf16[128,128], index: 9, kind: input, shape index: {}]
  %s10 = inlined_call_operand.vmem [shape: f32[1,128], index: 10, kind: input, shape index: {}]
  %s11 = inlined_call_operand.hbm [shape: bf16[128,128], index: 11, kind: input, shape index: {}]
  %s12 = inlined_call_operand.vmem [shape: f32[1,128], index: 12, kind: input, shape index: {}]
  %s13 = inlined_call_operand.hbm [shape: f32[16,128], index: 13, kind: output, shape index: {}]
  %s14 = sld [smem:[#allocation0]]
  $region94: #{tpu_custom_call.1} parent=0
    _
  %s16 = ssub.s32 1, %s14
  %s17 = scalar_select 0, %s16, %s14
  $region1: #{tpu_custom_call.1} parent=0
    #allocation2 [shape = 'u8[16384]{0}', space=vmem, size = 0x4000, scoped, tag = 'input window, operand 0, single buffered']
    #allocation3 [shape = 's32[1]{0}', space=sflag, size = 0x4, scoped, tag = 'scoped memory for tpu_custom_call.1']
    #allocation4 [shape = 's32[1]{0}', space=sflag, size = 0x4, scoped, tag = 'scoped memory for tpu_custom_call.1']
    #allocation5 [shape = 'u8[4096]{0}', space=vmem, size = 0x1000, scoped, tag = 'input window, operand 1, single buffered']
    #allocation6 [shape = 's32[1]{0}', space=sflag, size = 0x4, scoped, tag = 'scoped memory for tpu_custom_call.1']
    #allocation7 [shape = 'u8[32768]{0}', space=vmem, size = 0x8000, scoped, tag = 'input window, operand 2, single buffered']
    #allocation8 [shape = 'u8[32768]{0}', space=vmem, size = 0x8000, scoped, tag = 'input window, operand 4, single buffered']
    #allocation9 [shape = 's32[1]{0}', space=sflag, size = 0x4, scoped, tag = 'scoped memory for tpu_custom_call.1']
    #allocation10 [shape = 'u8[131072]{0}', space=vmem, size = 0x20000, scoped, tag = 'input window, operand 6, single buffered']
    #allocation11 [shape = 'u8[32768]{0}', space=vmem, size = 0x8000, scoped, tag = 'input window, operand 7, single buffered']
    #allocation12 [shape = 's32[1]{0}', space=sflag, size = 0x4, scoped, tag = 'scoped memory for tpu_custom_call.1']
    #allocation13 [shape = 'u8[32768]{0}', space=vmem, size = 0x8000, scoped, tag = 'input window, operand 9, single buffered']
    #allocation14 [shape = 'u8[32768]{0}', space=vmem, size = 0x8000, scoped, tag = 'input window, operand 11, single buffered']
    #allocation15 [shape = 's32[1]{0}', space=sflag, size = 0x4, scoped, tag = 'scoped memory for tpu_custom_call.1']
    #allocation16 [shape = 'u8[8192]{0}', space=vmem, size = 0x2000, scoped, tag = 'output window, operand 0, single buffered']
    %18 = vsyncpa [#allocation3], 0
    %19 = vsyncpa [#allocation6], 0
    %20 = vsyncpa [#allocation9], 0
    %21 = vsyncpa [#allocation12], 0
    %22 = vsyncpa [#allocation15], 0
    %23 = vsyncpa [#allocation4], 0
    // Predicated region
    $region2: #{tpu_custom_call.1} parent=1 // pred_check
      _
    $region3: #{tpu_custom_call.1} parent=1 // pred_check_branch
      %25 = sbr.rel (0) target = $region5
    $region4: #{tpu_custom_call.1} parent=1 // pred_region
      %s27 = ssub.s32 512, 512
      %28 = vsyncadd [#allocation3], %s27
      %s29 = sshll.u32 [#allocation2], 4
      %s30 = int_to_ptr.vmem [resolvable:$true] %s29
      %35 = dma.hbm_to_vmem [thread:$0]  %s0, 512, %s30, [#allocation3], 256, 256, 16
    $region5: #{tpu_custom_call.1} parent=1 // pred_fallthru
      _
    // Predicated region
    $region6: #{tpu_custom_call.1} parent=1 // pred_check
      _
    $region7: #{tpu_custom_call.1} parent=1 // pred_check_branch
      %37 = sbr.rel (0) target = $region9
    $region8: #{tpu_custom_call.1} parent=1 // pred_region
      %s39 = ssub.s32 128, 128
      %40 = vsyncadd [#allocation6], %s39
      %s41 = sshll.u32 [#allocation5], 4
      %s42 = int_to_ptr.vmem [resolvable:$true] %s41
      %47 = dma.hbm_to_vmem [thread:$0]  %s1, 128, %s42, [#allocation6], 64, 64, 4
    $region9: #{tpu_custom_call.1} parent=1 // pred_fallthru
      _
    // Predicated region
    $region10: #{tpu_custom_call.1} parent=1 // pred_check
      _
    $region11: #{tpu_custom_call.1} parent=1 // pred_check_branch
      %49 = sbr.rel (0) target = $region13
    $region12: #{tpu_custom_call.1} parent=1 // pred_region
      %s51 = ssub.s32 1024, 1024
      %52 = vsyncadd [#allocation6], %s51
      %s53 = sshll.u32 [#allocation7], 4
      %s54 = int_to_ptr.vmem [resolvable:$true] %s53
      %59 = dma.hbm_to_vmem [thread:$0]  %s2, 1024, %s54, [#allocation6], 64, 64, 4
    $region13: #{tpu_custom_call.1} parent=1 // pred_fallthru
      _
    // Predicated region
    $region14: #{tpu_custom_call.1} parent=1 // pred_check
      _
    $region15: #{tpu_custom_call.1} parent=1 // pred_check_branch
      %61 = sbr.rel (0) target = $region17
    $region16: #{tpu_custom_call.1} parent=1 // pred_region
      _
    $region17: #{tpu_custom_call.1} parent=1 // pred_fallthru
      _
    // Predicated region
    $region18: #{tpu_custom_call.1} parent=1 // pred_check
      _
    $region19: #{tpu_custom_call.1} parent=1 // pred_check_branch
      %63 = sbr.rel (0) target = $region21
    $region20: #{tpu_custom_call.1} parent=1 // pred_region
      %s65 = ssub.s32 1024, 1024
      %66 = vsyncadd [#allocation9], %s65
      %s67 = sshll.u32 [#allocation8], 4
      %s68 = int_to_ptr.vmem [resolvable:$true] %s67
      %73 = dma.hbm_to_vmem [thread:$0]  %s4, 1024, %s68, [#allocation9], 64, 64, 4
    $region21: #{tpu_custom_call.1} parent=1 // pred_fallthru
      _
    // Predicated region
    $region22: #{tpu_custom_call.1} parent=1 // pred_check
      _
    $region23: #{tpu_custom_call.1} parent=1 // pred_check_branch
      %75 = sbr.rel (0) target = $region25
    $region24: #{tpu_custom_call.1} parent=1 // pred_region
      _
    $region25: #{tpu_custom_call.1} parent=1 // pred_fallthru
      _
    // Predicated region
    $region26: #{tpu_custom_call.1} parent=1 // pred_check
      _
    $region27: #{tpu_custom_call.1} parent=1 // pred_check_branch
      %77 = sbr.rel (0) target = $region29
    $region28: #{tpu_custom_call.1} parent=1 // pred_region
      %s79 = ssub.s32 4096, 4096
      %80 = vsyncadd [#allocation9], %s79
      %s81 = sshll.u32 [#allocation10], 4
      %s82 = int_to_ptr.vmem [resolvable:$true] %s81
      %87 = dma.hbm_to_vmem [thread:$0]  %s6, 4096, %s82, [#allocation9], 64, 64, 4
    $region29: #{tpu_custom_call.1} parent=1 // pred_fallthru
      _
    // Predicated region
    $region30: #{tpu_custom_call.1} parent=1 // pred_check
      _
    $region31: #{tpu_custom_call.1} parent=1 // pred_check_branch
      %89 = sbr.rel (0) target = $region33
    $region32: #{tpu_custom_call.1} parent=1 // pred_region
      %s91 = ssub.s32 1024, 1024
      %92 = vsyncadd [#allocation12], %s91
      %s93 = sshll.u32 [#allocation11], 4
      %s94 = int_to_ptr.vmem [resolvable:$true] %s93
      %99 = dma.hbm_to_vmem [thread:$0]  %s7, 1024, %s94, [#allocation12], 64, 64, 4
    $region33: #{tpu_custom_call.1} parent=1 // pred_fallthru
      _
    // Predicated region
    $region34: #{tpu_custom_call.1} parent=1 // pred_check
      _
    $region35: #{tpu_custom_call.1} parent=1 // pred_check_branch
      %101 = sbr.rel (0) target = $region37
    $region36: #{tpu_custom_call.1} parent=1 // pred_region
      _
    $region37: #{tpu_custom_call.1} parent=1 // pred_fallthru
      _
    // Predicated region
    $region38: #{tpu_custom_call.1} parent=1 // pred_check
      _
    $region39: #{tpu_custom_call.1} parent=1 // pred_check_branch
      %103 = sbr.rel (0) target = $region41
    $region40: #{tpu_custom_call.1} parent=1 // pred_region
      %s105 = ssub.s32 1024, 1024
      %106 = vsyncadd [#allocation12], %s105
      %s107 = sshll.u32 [#allocation13], 4
      %s108 = int_to_ptr.vmem [resolvable:$true] %s107
      %113 = dma.hbm_to_vmem [thread:$0]  %s9, 1024, %s108, [#allocation12], 64, 64, 4
    $region41: #{tpu_custom_call.1} parent=1 // pred_fallthru
      _
    // Predicated region
    $region42: #{tpu_custom_call.1} parent=1 // pred_check
      _
    $region43: #{tpu_custom_call.1} parent=1 // pred_check_branch
      %115 = sbr.rel (0) target = $region45
    $region44: #{tpu_custom_call.1} parent=1 // pred_region
      _
    $region45: #{tpu_custom_call.1} parent=1 // pred_fallthru
      _
    // Predicated region
    $region46: #{tpu_custom_call.1} parent=1 // pred_check
      _
    $region47: #{tpu_custom_call.1} parent=1 // pred_check_branch
      %117 = sbr.rel (0) target = $region49
    $region48: #{tpu_custom_call.1} parent=1 // pred_region
      %s119 = ssub.s32 1024, 1024
      %120 = vsyncadd [#allocation15], %s119
      %s121 = sshll.u32 [#allocation14], 4
      %s122 = int_to_ptr.vmem [resolvable:$true] %s121
      %127 = dma.hbm_to_vmem [thread:$0]  %s11, 1024, %s122, [#allocation15], 64, 64, 4
    $region49: #{tpu_custom_call.1} parent=1 // pred_fallthru
      _
    // Predicated region
    $region50: #{tpu_custom_call.1} parent=1 // pred_check
      _
    $region51: #{tpu_custom_call.1} parent=1 // pred_check_branch
      %129 = sbr.rel (0) target = $region53
    $region52: #{tpu_custom_call.1} parent=1 // pred_region
      _
    $region53: #{tpu_custom_call.1} parent=1 // pred_fallthru
      _
    // Predicated region
    $region54: #{tpu_custom_call.1} parent=1 // pred_check
      _
    $region55: #{tpu_custom_call.1} parent=1 // pred_check_branch
      %131 = sbr.rel (0) target = $region57
    $region56: #{tpu_custom_call.1} parent=1 // pred_region
      %132 = dma.done [#allocation3], 512
    $region57: #{tpu_custom_call.1} parent=1 // pred_fallthru
      _
    // Predicated region
    $region58: #{tpu_custom_call.1} parent=1 // pred_check
      _
    $region59: #{tpu_custom_call.1} parent=1 // pred_check_branch
      %134 = sbr.rel (0) target = $region61
    $region60: #{tpu_custom_call.1} parent=1 // pred_region
      %135 = dma.done [#allocation6], 128
    $region61: #{tpu_custom_call.1} parent=1 // pred_fallthru
      _
    // Predicated region
    $region62: #{tpu_custom_call.1} parent=1 // pred_check
      _
    $region63: #{tpu_custom_call.1} parent=1 // pred_check_branch
      %137 = sbr.rel (0) target = $region65
    $region64: #{tpu_custom_call.1} parent=1 // pred_region
      %138 = dma.done [#allocation6], 1024
    $region65: #{tpu_custom_call.1} parent=1 // pred_fallthru
      _
    // Predicated region
    $region66: #{tpu_custom_call.1} parent=1 // pred_check
      _
    $region67: #{tpu_custom_call.1} parent=1 // pred_check_branch
      %140 = sbr.rel (0) target = $region69
    $region68: #{tpu_custom_call.1} parent=1 // pred_region
      %141 = dma.done [#allocation9], 1024
    $region69: #{tpu_custom_call.1} parent=1 // pred_fallthru
      _
    // Predicated region
    $region70: #{tpu_custom_call.1} parent=1 // pred_check
      _
    $region71: #{tpu_custom_call.1} parent=1 // pred_check_branch
      %143 = sbr.rel (0) target = $region73
    $region72: #{tpu_custom_call.1} parent=1 // pred_region
      %144 = dma.done [#allocation9], 4096
    $region73: #{tpu_custom_call.1} parent=1 // pred_fallthru
      _
    // Predicated region
    $region74: #{tpu_custom_call.1} parent=1 // pred_check
      _
    $region75: #{tpu_custom_call.1} parent=1 // pred_check_branch
      %146 = sbr.rel (0) target = $region77
    $region76: #{tpu_custom_call.1} parent=1 // pred_region
      %147 = dma.done [#allocation12], 1024
    $region77: #{tpu_custom_call.1} parent=1 // pred_fallthru
      _
    // Predicated region
    $region78: #{tpu_custom_call.1} parent=1 // pred_check
      _
    $region79: #{tpu_custom_call.1} parent=1 // pred_check_branch
      %149 = sbr.rel (0) target = $region81
    $region80: #{tpu_custom_call.1} parent=1 // pred_region
      %150 = dma.done [#allocation12], 1024
    $region81: #{tpu_custom_call.1} parent=1 // pred_fallthru
      _
    // Predicated region
    $region82: #{tpu_custom_call.1} parent=1 // pred_check
      _
    $region83: #{tpu_custom_call.1} parent=1 // pred_check_branch
      %152 = sbr.rel (0) target = $region85
    $region84: #{tpu_custom_call.1} parent=1 // pred_region
      %153 = dma.done [#allocation15], 1024
    $region85: #{tpu_custom_call.1} parent=1 // pred_fallthru
      _
    %v155 = vld [vmem:[#allocation5] sm:$0xf]
    %v156 = vld [vmem:[#allocation5 + $0x4] sm:$0xf]
    %v157 = vld [vmem:[#allocation7] sm:$0xf]
    %v158 = vld [vmem:[#allocation7 + $0x4] sm:$0xf]
    %v159 = vld [vmem:[#allocation7 + $0x8] sm:$0xf]
    %v160 = vld [vmem:[#allocation7 + $0xc] sm:$0xf]
    %v161 = vld [vmem:[#allocation7 + $0x10] sm:$0xf]
    %v162 = vld [vmem:[#allocation7 + $0x14] sm:$0xf]
    %v163 = vld [vmem:[#allocation7 + $0x18] sm:$0xf]
    %v164 = vld [vmem:[#allocation7 + $0x1c] sm:$0xf]
    %v165 = vld [vmem:[#allocation7 + $0x20] sm:$0xf]
    %v166 = vld [vmem:[#allocation7 + $0x24] sm:$0xf]
    %v167 = vld [vmem:[#allocation7 + $0x28] sm:$0xf]
    %v168 = vld [vmem:[#allocation7 + $0x2c] sm:$0xf]
    %v169 = vld [vmem:[#allocation7 + $0x30] sm:$0xf]
    %v170 = vld [vmem:[#allocation7 + $0x34] sm:$0xf]
    %v171 = vld [vmem:[#allocation7 + $0x38] sm:$0xf]
    %v172 = vld [vmem:[#allocation7 + $0x3c] sm:$0xf]
    %v173 = vld [vmem:[%s3] sm:$0x1]
    %v175 = vlaneseq
    %v176 = vshrl.u32 %v175, 7
    %v177 = vsub.s32 0, %v176
    %v178 = vrot.slane %v173, %v177
    %v182 = vunpack.c.l.b16 %v155
    %v183 = vunpack.c.l.b16 %v156
    %v184 = vpack.c.b16 %v183, %v182
    %v202 = vunpack.c.l.b16 %v157
    %v203 = vunpack.c.l.b16 %v158
    %v204 = vunpack.c.l.b16 %v159
    %v205 = vunpack.c.l.b16 %v160
    %v206 = vunpack.c.l.b16 %v161
    %v207 = vunpack.c.l.b16 %v162
    %v208 = vunpack.c.l.b16 %v163
    %v209 = vunpack.c.l.b16 %v164
    %v210 = vunpack.c.l.b16 %v165
    %v211 = vunpack.c.l.b16 %v166
    %v212 = vunpack.c.l.b16 %v167
    %v213 = vunpack.c.l.b16 %v168
    %v214 = vunpack.c.l.b16 %v169
    %v215 = vunpack.c.l.b16 %v170
    %v216 = vunpack.c.l.b16 %v171
    %v217 = vunpack.c.l.b16 %v172
    %v218 = vpack.c.b16 %v203, %v202
    %v219 = vpack.c.b16 %v205, %v204
    %v220 = vpack.c.b16 %v207, %v206
    %v221 = vpack.c.b16 %v209, %v208
    %v222 = vpack.c.b16 %v211, %v210
    %v223 = vpack.c.b16 %v213, %v212
    %v224 = vpack.c.b16 %v215, %v214
    %v225 = vpack.c.b16 %v217, %v216
    %234 = vmatprep.subr.bf16.mxu0 0
    %235 = vmatpush1.bf16.msra.mxu0 %v218
    %236 = vmatprep.subr.bf16.mxu0 0
    %237 = vmatpush1.bf16.msra.mxu0 %v219
    %238 = vmatprep.subr.bf16.mxu0 0
    %239 = vmatpush1.bf16.msra.mxu0 %v220
    %240 = vmatprep.subr.bf16.mxu0 0
    %241 = vmatpush1.bf16.msra.mxu0 %v221
    %242 = vmatprep.subr.bf16.mxu0 0
    %243 = vmatpush1.bf16.msra.mxu0 %v222
    %244 = vmatprep.subr.bf16.mxu0 0
    %245 = vmatpush1.bf16.msra.mxu0 %v223
    %246 = vmatprep.subr.bf16.mxu0 0
    %247 = vmatpush1.bf16.msra.mxu0 %v224
    %248 = vmatprep.subr.bf16.mxu0 0
    %249 = vmatpush1.bf16.msra.mxu0 %v225
    %250 = vmatprep.subr.bf16.mxu0 0
    %251 = vmatpush1.bf16.msra.mxu0 0
    %252 = vmatprep.subr.bf16.mxu0 0
    %253 = vmatpush1.bf16.msra.mxu0 0
    %254 = vmatprep.subr.bf16.mxu0 0
    %255 = vmatpush1.bf16.msra.mxu0 0
    %256 = vmatprep.subr.bf16.mxu0 0
    %257 = vmatpush1.bf16.msra.mxu0 0
    %258 = vmatprep.subr.bf16.mxu0 0
    %259 = vmatpush1.bf16.msra.mxu0 0
    %260 = vmatprep.subr.bf16.mxu0 0
    %261 = vmatpush1.bf16.msra.mxu0 0
    %262 = vmatprep.subr.bf16.mxu0 0
    %263 = vmatpush1.bf16.msra.mxu0 0
    %264 = vmatprep.subr.bf16.mxu0 0
    %265 = vmatpush1.bf16.msra.mxu0 0
    %266 = vmatprep.mubr.bf16.mxu0 0
    %267 = vmatmul.mubr.bf16.gmra.mrb[0].mxu0 %v184
    %v268 = vpop.f32.mrb[0].mxu0
    %v269 = vadd.f32 %v178, %v268
    %v270 = vpop.f32.mrb[0].mxu0
    %v271 = vpop.f32.mrb[0].mxu0
    %v272 = vadd.f32 %v178, %v271
    %v273 = vpop.f32.mrb[0].mxu0
    %274 = vdwg.mxu0
    %v275 = vmax.f32 %v269, 0.0
    %v276 = vmax.f32 %v272, 0.0
    %v277 = vpack.c.bf16 %v276, %v275
    %v278 = vld [vmem:[#allocation8] sm:$0xf]
    %v279 = vld [vmem:[#allocation8 + $0x4] sm:$0xf]
    %v280 = vld [vmem:[#allocation8 + $0x8] sm:$0xf]
    %v281 = vld [vmem:[#allocation8 + $0xc] sm:$0xf]
    %v282 = vld [vmem:[#allocation8 + $0x10] sm:$0xf]
    %v283 = vld [vmem:[#allocation8 + $0x14] sm:$0xf]
    %v284 = vld [vmem:[#allocation8 + $0x18] sm:$0xf]
    %v285 = vld [vmem:[#allocation8 + $0x1c] sm:$0xf]
    %v286 = vld [vmem:[#allocation8 + $0x20] sm:$0xf]
    %v287 = vld [vmem:[#allocation8 + $0x24] sm:$0xf]
    %v288 = vld [vmem:[#allocation8 + $0x28] sm:$0xf]
    %v289 = vld [vmem:[#allocation8 + $0x2c] sm:$0xf]
    %v290 = vld [vmem:[#allocation8 + $0x30] sm:$0xf]
    %v291 = vld [vmem:[#allocation8 + $0x34] sm:$0xf]
    %v292 = vld [vmem:[#allocation8 + $0x38] sm:$0xf]
    %v293 = vld [vmem:[#allocation8 + $0x3c] sm:$0xf]
    %v294 = vld [vmem:[%s5] sm:$0x1]
    %v296 = vlaneseq
    %v297 = vshrl.u32 %v296, 7
    %v298 = vsub.s32 0, %v297
    %v299 = vrot.slane %v294, %v298
    %v317 = vunpack.c.l.b16 %v278
    %v318 = vunpack.c.l.b16 %v279
    %v319 = vunpack.c.l.b16 %v280
    %v320 = vunpack.c.l.b16 %v281
    %v321 = vunpack.c.l.b16 %v282
    %v322 = vunpack.c.l.b16 %v283
    %v323 = vunpack.c.l.b16 %v284
    %v324 = vunpack.c.l.b16 %v285
    %v325 = vunpack.c.l.b16 %v286
    %v326 = vunpack.c.l.b16 %v287
    %v327 = vunpack.c.l.b16 %v288
    %v328 = vunpack.c.l.b16 %v289
    %v329 = vunpack.c.l.b16 %v290
    %v330 = vunpack.c.l.b16 %v291
    %v331 = vunpack.c.l.b16 %v292
    %v332 = vunpack.c.l.b16 %v293
    %v333 = vpack.c.b16 %v318, %v317
    %v334 = vpack.c.b16 %v320, %v319
    %v335 = vpack.c.b16 %v322, %v321
    %v336 = vpack.c.b16 %v324, %v323
    %v337 = vpack.c.b16 %v326, %v325
    %v338 = vpack.c.b16 %v328, %v327
    %v339 = vpack.c.b16 %v330, %v329
    %v340 = vpack.c.b16 %v332, %v331
    %349 = vmatprep.subr.bf16.mxu0 0
    %350 = vmatpush1.bf16.msra.mxu0 %v333
    %351 = vmatprep.subr.bf16.mxu0 0
    %352 = vmatpush1.bf16.msra.mxu0 %v334
    %353 = vmatprep.subr.bf16.mxu0 0
    %354 = vmatpush1.bf16.msra.mxu0 %v335
    %355 = vmatprep.subr.bf16.mxu0 0
    %356 = vmatpush1.bf16.msra.mxu0 %v336
    %357 = vmatprep.subr.bf16.mxu0 0
    %358 = vmatpush1.bf16.msra.mxu0 %v337
    %359 = vmatprep.subr.bf16.mxu0 0
    %360 = vmatpush1.bf16.msra.mxu0 %v338
    %361 = vmatprep.subr.bf16.mxu0 0
    %362 = vmatpush1.bf16.msra.mxu0 %v339
    %363 = vmatprep.subr.bf16.mxu0 0
    %364 = vmatpush1.bf16.msra.mxu0 %v340
    %365 = vmatprep.subr.bf16.mxu0 0
    %366 = vmatpush1.bf16.msra.mxu0 0
    %367 = vmatprep.subr.bf16.mxu0 0
    %368 = vmatpush1.bf16.msra.mxu0 0
    %369 = vmatprep.subr.bf16.mxu0 0
    %370 = vmatpush1.bf16.msra.mxu0 0
    %371 = vmatprep.subr.bf16.mxu0 0
    %372 = vmatpush1.bf16.msra.mxu0 0
    %373 = vmatprep.subr.bf16.mxu0 0
    %374 = vmatpush1.bf16.msra.mxu0 0
    %375 = vmatprep.subr.bf16.mxu0 0
    %376 = vmatpush1.bf16.msra.mxu0 0
    %377 = vmatprep.subr.bf16.mxu0 0
    %378 = vmatpush1.bf16.msra.mxu0 0
    %379 = vmatprep.subr.bf16.mxu0 0
    %380 = vmatpush1.bf16.msra.mxu0 0
    %381 = vmatprep.mubr.bf16.mxu0 0
    %382 = vmatmul.mubr.bf16.gmra.mrb[0].mxu0 %v277
    %v383 = vpop.f32.mrb[0].mxu0
    %v384 = vadd.f32 %v299, %v383
    %v385 = vpop.f32.mrb[0].mxu0
    %v386 = vpop.f32.mrb[0].mxu0
    %v387 = vadd.f32 %v299, %v386
    %v388 = vpop.f32.mrb[0].mxu0
    %389 = vdwg.mxu0
    %v390 = vmax.f32 %v384, 0.0
    %v391 = vmax.f32 %v387, 0.0
    %v392 = vld [vmem:[#allocation2] sm:$0xff]
    %v393 = vld [vmem:[#allocation2 + $0x8] sm:$0xff]
    %v394 = vld [vmem:[#allocation2 + $0x10] sm:$0xff]
    %v395 = vld [vmem:[#allocation2 + $0x18] sm:$0xff]
    %v396 = vld [vmem:[#allocation10] sm:$0xf]
    %v397 = vld [vmem:[#allocation10 + $0x4] sm:$0xf]
    %v398 = vld [vmem:[#allocation10 + $0x8] sm:$0xf]
    %v399 = vld [vmem:[#allocation10 + $0xc] sm:$0xf]
    %v400 = vld [vmem:[#allocation10 + $0x10] sm:$0xf]
    %v401 = vld [vmem:[#allocation10 + $0x14] sm:$0xf]
    %v402 = vld [vmem:[#allocation10 + $0x18] sm:$0xf]
    %v403 = vld [vmem:[#allocation10 + $0x1c] sm:$0xf]
    %v404 = vld [vmem:[#allocation10 + $0x20] sm:$0xf]
    %v405 = vld [vmem:[#allocation10 + $0x24] sm:$0xf]
    %v406 = vld [vmem:[#allocation10 + $0x28] sm:$0xf]
    %v407 = vld [vmem:[#allocation10 + $0x2c] sm:$0xf]
    %v408 = vld [vmem:[#allocation10 + $0x30] sm:$0xf]
    %v409 = vld [vmem:[#allocation10 + $0x34] sm:$0xf]
    %v410 = vld [vmem:[#allocation10 + $0x38] sm:$0xf]
    %v411 = vld [vmem:[#allocation10 + $0x3c] sm:$0xf]
    %v412 = vld [vmem:[#allocation10 + $0x40] sm:$0xf]
    %v413 = vld [vmem:[#allocation10 + $0x44] sm:$0xf]
    %v414 = vld [vmem:[#allocation10 + $0x48] sm:$0xf]
    %v415 = vld [vmem:[#allocation10 + $0x4c] sm:$0xf]
    %v416 = vld [vmem:[#allocation10 + $0x50] sm:$0xf]
    %v417 = vld [vmem:[#allocation10 + $0x54] sm:$0xf]
    %v418 = vld [vmem:[#allocation10 + $0x58] sm:$0xf]
    %v419 = vld [vmem:[#allocation10 + $0x5c] sm:$0xf]
    %v420 = vld [vmem:[#allocation10 + $0x60] sm:$0xf]
    %v421 = vld [vmem:[#allocation10 + $0x64] sm:$0xf]
    %v422 = vld [vmem:[#allocation10 + $0x68] sm:$0xf]
    %v423 = vld [vmem:[#allocation10 + $0x6c] sm:$0xf]
    %v424 = vld [vmem:[#allocation10 + $0x70] sm:$0xf]
    %v425 = vld [vmem:[#allocation10 + $0x74] sm:$0xf]
    %v426 = vld [vmem:[#allocation10 + $0x78] sm:$0xf]
    %v427 = vld [vmem:[#allocation10 + $0x7c] sm:$0xf]
    %v428 = vld [vmem:[#allocation10 + $0x80] sm:$0xf]
    %v429 = vld [vmem:[#allocation10 + $0x84] sm:$0xf]
    %v430 = vld [vmem:[#allocation10 + $0x88] sm:$0xf]
    %v431 = vld [vmem:[#allocation10 + $0x8c] sm:$0xf]
    %v432 = vld [vmem:[#allocation10 + $0x90] sm:$0xf]
    %v433 = vld [vmem:[#allocation10 + $0x94] sm:$0xf]
    %v434 = vld [vmem:[#allocation10 + $0x98] sm:$0xf]
    %v435 = vld [vmem:[#allocation10 + $0x9c] sm:$0xf]
    %v436 = vld [vmem:[#allocation10 + $0xa0] sm:$0xf]
    %v437 = vld [vmem:[#allocation10 + $0xa4] sm:$0xf]
    %v438 = vld [vmem:[#allocation10 + $0xa8] sm:$0xf]
    %v439 = vld [vmem:[#allocation10 + $0xac] sm:$0xf]
    %v440 = vld [vmem:[#allocation10 + $0xb0] sm:$0xf]
    %v441 = vld [vmem:[#allocation10 + $0xb4] sm:$0xf]
    %v442 = vld [vmem:[#allocation10 + $0xb8] sm:$0xf]
    %v443 = vld [vmem:[#allocation10 + $0xbc] sm:$0xf]
    %v444 = vld [vmem:[#allocation10 + $0xc0] sm:$0xf]
    %v445 = vld [vmem:[#allocation10 + $0xc4] sm:$0xf]
    %v446 = vld [vmem:[#allocation10 + $0xc8] sm:$0xf]
    %v447 = vld [vmem:[#allocation10 + $0xcc] sm:$0xf]
    %v448 = vld [vmem:[#allocation10 + $0xd0] sm:$0xf]
    %v449 = vld [vmem:[#allocation10 + $0xd4] sm:$0xf]
    %v450 = vld [vmem:[#allocation10 + $0xd8] sm:$0xf]
    %v451 = vld [vmem:[#allocation10 + $0xdc] sm:$0xf]
    %v452 = vld [vmem:[#allocation10 + $0xe0] sm:$0xf]
    %v453 = vld [vmem:[#allocation10 + $0xe4] sm:$0xf]
    %v454 = vld [vmem:[#allocation10 + $0xe8] sm:$0xf]
    %v455 = vld [vmem:[#allocation10 + $0xec] sm:$0xf]
    %v456 = vld [vmem:[#allocation10 + $0xf0] sm:$0xf]
    %v457 = vld [vmem:[#allocation10 + $0xf4] sm:$0xf]
    %v458 = vld [vmem:[#allocation10 + $0xf8] sm:$0xf]
    %v459 = vld [vmem:[#allocation10 + $0xfc] sm:$0xf]
    %v460 = vpack.c.bf16 %v391, %v390
    %v461 = vld [vmem:[#allocation11] sm:$0xf]
    %v462 = vld [vmem:[#allocation11 + $0x4] sm:$0xf]
    %v463 = vld [vmem:[#allocation11 + $0x8] sm:$0xf]
    %v464 = vld [vmem:[#allocation11 + $0xc] sm:$0xf]
    %v465 = vld [vmem:[#allocation11 + $0x10] sm:$0xf]
    %v466 = vld [vmem:[#allocation11 + $0x14] sm:$0xf]
    %v467 = vld [vmem:[#allocation11 + $0x18] sm:$0xf]
    %v468 = vld [vmem:[#allocation11 + $0x1c] sm:$0xf]
    %v469 = vld [vmem:[#allocation11 + $0x20] sm:$0xf]
    %v470 = vld [vmem:[#allocation11 + $0x24] sm:$0xf]
    %v471 = vld [vmem:[#allocation11 + $0x28] sm:$0xf]
    %v472 = vld [vmem:[#allocation11 + $0x2c] sm:$0xf]
    %v473 = vld [vmem:[#allocation11 + $0x30] sm:$0xf]
    %v474 = vld [vmem:[#allocation11 + $0x34] sm:$0xf]
    %v475 = vld [vmem:[#allocation11 + $0x38] sm:$0xf]
    %v476 = vld [vmem:[#allocation11 + $0x3c] sm:$0xf]
    %v493 = vunpack.c.l.b16 %v461
    %v494 = vunpack.c.l.b16 %v462
    %v495 = vunpack.c.l.b16 %v463
    %v496 = vunpack.c.l.b16 %v464
    %v497 = vunpack.c.l.b16 %v465
    %v498 = vunpack.c.l.b16 %v466
    %v499 = vunpack.c.l.b16 %v467
    %v500 = vunpack.c.l.b16 %v468
    %v501 = vunpack.c.l.b16 %v469
    %v502 = vunpack.c.l.b16 %v470
    %v503 = vunpack.c.l.b16 %v471
    %v504 = vunpack.c.l.b16 %v472
    %v505 = vunpack.c.l.b16 %v473
    %v506 = vunpack.c.l.b16 %v474
    %v507 = vunpack.c.l.b16 %v475
    %v508 = vunpack.c.l.b16 %v476
    %v509 = vpack.c.b16 %v494, %v493
    %v510 = vpack.c.b16 %v496, %v495
    %v511 = vpack.c.b16 %v498, %v497
    %v512 = vpack.c.b16 %v500, %v499
    %v513 = vpack.c.b16 %v502, %v501
    %v514 = vpack.c.b16 %v504, %v503
    %v515 = vpack.c.b16 %v506, %v505
    %v516 = vpack.c.b16 %v508, %v507
    %525 = vmatprep.subr.bf16.mxu0 0
    %526 = vmatpush1.bf16.msra.mxu0 %v509
    %527 = vmatprep.subr.bf16.mxu0 0
    %528 = vmatpush1.bf16.msra.mxu0 %v510
    %529 = vmatprep.subr.bf16.mxu0 0
    %530 = vmatpush1.bf16.msra.mxu0 %v511
    %531 = vmatprep.subr.bf16.mxu0 0
    %532 = vmatpush1.bf16.msra.mxu0 %v512
    %533 = vmatprep.subr.bf16.mxu0 0
    %534 = vmatpush1.bf16.msra.mxu0 %v513
    %535 = vmatprep.subr.bf16.mxu0 0
    %536 = vmatpush1.bf16.msra.mxu0 %v514
    %537 = vmatprep.subr.bf16.mxu0 0
    %538 = vmatpush1.bf16.msra.mxu0 %v515
    %539 = vmatprep.subr.bf16.mxu0 0
    %540 = vmatpush1.bf16.msra.mxu0 %v516
    %541 = vmatprep.subr.bf16.mxu0 0
    %542 = vmatpush1.bf16.msra.mxu0 0
    %543 = vmatprep.subr.bf16.mxu0 0
    %544 = vmatpush1.bf16.msra.mxu0 0
    %545 = vmatprep.subr.bf16.mxu0 0
    %546 = vmatpush1.bf16.msra.mxu0 0
    %547 = vmatprep.subr.bf16.mxu0 0
    %548 = vmatpush1.bf16.msra.mxu0 0
    %549 = vmatprep.subr.bf16.mxu0 0
    %550 = vmatpush1.bf16.msra.mxu0 0
    %551 = vmatprep.subr.bf16.mxu0 0
    %552 = vmatpush1.bf16.msra.mxu0 0
    %553 = vmatprep.subr.bf16.mxu0 0
    %554 = vmatpush1.bf16.msra.mxu0 0
    %555 = vmatprep.subr.bf16.mxu0 0
    %556 = vmatpush1.bf16.msra.mxu0 0
    %557 = vmatprep.mubr.bf16.mxu0 0
    %558 = vmatmul.mubr.bf16.gmra.mrb[0].mxu0 %v460
    %v559 = vpop.f32.mrb[0].mxu0
    %v560 = vadd.f32 0.0, %v559
    %v561 = vpop.f32.mrb[0].mxu0
    %v562 = vpop.f32.mrb[0].mxu0
    %v563 = vadd.f32 0.0, %v562
    %v564 = vpop.f32.mrb[0].mxu0
    %565 = vdwg.mxu0
    %v570 = vunpack.c.l.b16 %v392
    %v571 = vunpack.c.h.b16 %v392
    %v572 = vunpack.c.l.b16 %v393
    %v573 = vunpack.c.h.b16 %v393
    %v574 = vunpack.c.l.b16 %v394
    %v575 = vunpack.c.h.b16 %v394
    %v576 = vunpack.c.l.b16 %v395
    %v577 = vunpack.c.h.b16 %v395
    %v578 = vpack.c.b16 %v574, %v570
    %v579 = vpack.c.b16 %v575, %v571
    %v580 = vpack.c.b16 %v576, %v572
    %v581 = vpack.c.b16 %v577, %v573
    %v650 = vunpack.c.l.b16 %v396
    %v651 = vunpack.c.l.b16 %v397
    %v652 = vunpack.c.l.b16 %v398
    %v653 = vunpack.c.l.b16 %v399
    %v654 = vunpack.c.l.b16 %v400
    %v655 = vunpack.c.l.b16 %v401
    %v656 = vunpack.c.l.b16 %v402
    %v657 = vunpack.c.l.b16 %v403
    %v658 = vunpack.c.l.b16 %v404
    %v659 = vunpack.c.l.b16 %v405
    %v660 = vunpack.c.l.b16 %v406
    %v661 = vunpack.c.l.b16 %v407
    %v662 = vunpack.c.l.b16 %v408
    %v663 = vunpack.c.l.b16 %v409
    %v664 = vunpack.c.l.b16 %v410
    %v665 = vunpack.c.l.b16 %v411
    %v666 = vunpack.c.l.b16 %v412
    %v667 = vunpack.c.l.b16 %v413
    %v668 = vunpack.c.l.b16 %v414
    %v669 = vunpack.c.l.b16 %v415
    %v670 = vunpack.c.l.b16 %v416
    %v671 = vunpack.c.l.b16 %v417
    %v672 = vunpack.c.l.b16 %v418
    %v673 = vunpack.c.l.b16 %v419
    %v674 = vunpack.c.l.b16 %v420
    %v675 = vunpack.c.l.b16 %v421
    %v676 = vunpack.c.l.b16 %v422
    %v677 = vunpack.c.l.b16 %v423
    %v678 = vunpack.c.l.b16 %v424
    %v679 = vunpack.c.l.b16 %v425
    %v680 = vunpack.c.l.b16 %v426
    %v681 = vunpack.c.l.b16 %v427
    %v682 = vunpack.c.l.b16 %v428
    %v683 = vunpack.c.l.b16 %v429
    %v684 = vunpack.c.l.b16 %v430
    %v685 = vunpack.c.l.b16 %v431
    %v686 = vunpack.c.l.b16 %v432
    %v687 = vunpack.c.l.b16 %v433
    %v688 = vunpack.c.l.b16 %v434
    %v689 = vunpack.c.l.b16 %v435
    %v690 = vunpack.c.l.b16 %v436
    %v691 = vunpack.c.l.b16 %v437
    %v692 = vunpack.c.l.b16 %v438
    %v693 = vunpack.c.l.b16 %v439
    %v694 = vunpack.c.l.b16 %v440
    %v695 = vunpack.c.l.b16 %v441
    %v696 = vunpack.c.l.b16 %v442
    %v697 = vunpack.c.l.b16 %v443
    %v698 = vunpack.c.l.b16 %v444
    %v699 = vunpack.c.l.b16 %v445
    %v700 = vunpack.c.l.b16 %v446
    %v701 = vunpack.c.l.b16 %v447
    %v702 = vunpack.c.l.b16 %v448
    %v703 = vunpack.c.l.b16 %v449
    %v704 = vunpack.c.l.b16 %v450
    %v705 = vunpack.c.l.b16 %v451
    %v706 = vunpack.c.l.b16 %v452
    %v707 = vunpack.c.l.b16 %v453
    %v708 = vunpack.c.l.b16 %v454
    %v709 = vunpack.c.l.b16 %v455
    %v710 = vunpack.c.l.b16 %v456
    %v711 = vunpack.c.l.b16 %v457
    %v712 = vunpack.c.l.b16 %v458
    %v713 = vunpack.c.l.b16 %v459
    %v714 = vpack.c.b16 %v651, %v650
    %v715 = vpack.c.b16 %v653, %v652
    %v716 = vpack.c.b16 %v655, %v654
    %v717 = vpack.c.b16 %v657, %v656
    %v718 = vpack.c.b16 %v659, %v658
    %v719 = vpack.c.b16 %v661, %v660
    %v720 = vpack.c.b16 %v663, %v662
    %v721 = vpack.c.b16 %v665, %v664
    %v722 = vpack.c.b16 %v667, %v666
    %v723 = vpack.c.b16 %v669, %v668
    %v724 = vpack.c.b16 %v671, %v670
    %v725 = vpack.c.b16 %v673, %v672
    %v726 = vpack.c.b16 %v675, %v674
    %v727 = vpack.c.b16 %v677, %v676
    %v728 = vpack.c.b16 %v679, %v678
    %v729 = vpack.c.b16 %v681, %v680
    %v730 = vpack.c.b16 %v683, %v682
    %v731 = vpack.c.b16 %v685, %v684
    %v732 = vpack.c.b16 %v687, %v686
    %v733 = vpack.c.b16 %v689, %v688
    %v734 = vpack.c.b16 %v691, %v690
    %v735 = vpack.c.b16 %v693, %v692
    %v736 = vpack.c.b16 %v695, %v694
    %v737 = vpack.c.b16 %v697, %v696
    %v738 = vpack.c.b16 %v699, %v698
    %v739 = vpack.c.b16 %v701, %v700
    %v740 = vpack.c.b16 %v703, %v702
    %v741 = vpack.c.b16 %v705, %v704
    %v742 = vpack.c.b16 %v707, %v706
    %v743 = vpack.c.b16 %v709, %v708
    %v744 = vpack.c.b16 %v711, %v710
    %v745 = vpack.c.b16 %v713, %v712
    %778 = vmatprep.subr.bf16.mxu0 0
    %779 = vmatpush1.bf16.msra.mxu0 %v714
    %780 = vmatprep.subr.bf16.mxu0 0
    %781 = vmatpush1.bf16.msra.mxu0 %v715
    %782 = vmatprep.subr.bf16.mxu0 0
    %783 = vmatpush1.bf16.msra.mxu0 %v716
    %784 = vmatprep.subr.bf16.mxu0 0
    %785 = vmatpush1.bf16.msra.mxu0 %v717
    %786 = vmatprep.subr.bf16.mxu0 0
    %787 = vmatpush1.bf16.msra.mxu0 %v718
    %788 = vmatprep.subr.bf16.mxu0 0
    %789 = vmatpush1.bf16.msra.mxu0 %v719
    %790 = vmatprep.subr.bf16.mxu0 0
    %791 = vmatpush1.bf16.msra.mxu0 %v720
    %792 = vmatprep.subr.bf16.mxu0 0
    %793 = vmatpush1.bf16.msra.mxu0 %v721
    %794 = vmatprep.subr.bf16.mxu0 0
    %795 = vmatpush1.bf16.msra.mxu0 %v722
    %796 = vmatprep.subr.bf16.mxu0 0
    %797 = vmatpush1.bf16.msra.mxu0 %v723
    %798 = vmatprep.subr.bf16.mxu0 0
    %799 = vmatpush1.bf16.msra.mxu0 %v724
    %800 = vmatprep.subr.bf16.mxu0 0
    %801 = vmatpush1.bf16.msra.mxu0 %v725
    %802 = vmatprep.subr.bf16.mxu0 0
    %803 = vmatpush1.bf16.msra.mxu0 %v726
    %804 = vmatprep.subr.bf16.mxu0 0
    %805 = vmatpush1.bf16.msra.mxu0 %v727
    %806 = vmatprep.subr.bf16.mxu0 0
    %807 = vmatpush1.bf16.msra.mxu0 %v728
    %808 = vmatprep.subr.bf16.mxu0 0
    %809 = vmatpush1.bf16.msra.mxu0 %v729
    %810 = vmatprep.mubr.bf16.mxu0 %v579
    %811 = vmatmul.mubr.bf16.gmra.mrb[0].mxu0 %v578
    %v812 = vpop.f32.mrb[0].mxu0
    %v813 = vadd.f32 %v560, %v812
    %v814 = vpop.f32.mrb[0].mxu0
    %v815 = vpop.f32.mrb[0].mxu0
    %v816 = vadd.f32 %v563, %v815
    %v817 = vpop.f32.mrb[0].mxu0
    %818 = vdwg.mxu0
    %819 = vmatprep.subr.bf16.mxu0 0
    %820 = vmatpush1.bf16.msra.mxu0 %v730
    %821 = vmatprep.subr.bf16.mxu0 0
    %822 = vmatpush1.bf16.msra.mxu0 %v731
    %823 = vmatprep.subr.bf16.mxu0 0
    %824 = vmatpush1.bf16.msra.mxu0 %v732
    %825 = vmatprep.subr.bf16.mxu0 0
    %826 = vmatpush1.bf16.msra.mxu0 %v733
    %827 = vmatprep.subr.bf16.mxu0 0
    %828 = vmatpush1.bf16.msra.mxu0 %v734
    %829 = vmatprep.subr.bf16.mxu0 0
    %830 = vmatpush1.bf16.msra.mxu0 %v735
    %831 = vmatprep.subr.bf16.mxu0 0
    %832 = vmatpush1.bf16.msra.mxu0 %v736
    %833 = vmatprep.subr.bf16.mxu0 0
    %834 = vmatpush1.bf16.msra.mxu0 %v737
    %835 = vmatprep.subr.bf16.mxu0 0
    %836 = vmatpush1.bf16.msra.mxu0 %v738
    %837 = vmatprep.subr.bf16.mxu0 0
    %838 = vmatpush1.bf16.msra.mxu0 %v739
    %839 = vmatprep.subr.bf16.mxu0 0
    %840 = vmatpush1.bf16.msra.mxu0 %v740
    %841 = vmatprep.subr.bf16.mxu0 0
    %842 = vmatpush1.bf16.msra.mxu0 %v741
    %843 = vmatprep.subr.bf16.mxu0 0
    %844 = vmatpush1.bf16.msra.mxu0 %v742
    %845 = vmatprep.subr.bf16.mxu0 0
    %846 = vmatpush1.bf16.msra.mxu0 %v743
    %847 = vmatprep.subr.bf16.mxu0 0
    %848 = vmatpush1.bf16.msra.mxu0 %v744
    %849 = vmatprep.subr.bf16.mxu0 0
    %850 = vmatpush1.bf16.msra.mxu0 %v745
    %851 = vmatprep.mubr.bf16.mxu0 %v581
    %852 = vmatmul.mubr.bf16.gmra.mrb[0].mxu0 %v580
    %v853 = vpop.f32.mrb[0].mxu0
    %v854 = vadd.f32 %v813, %v853
    %v855 = vpop.f32.mrb[0].mxu0
    %v856 = vpop.f32.mrb[0].mxu0
    %v857 = vadd.f32 %v816, %v856
    %v858 = vpop.f32.mrb[0].mxu0
    %859 = vdwg.mxu0
    %v860 = vld [vmem:[%s8] sm:$0x1]
    %v862 = vlaneseq
    %v863 = vshrl.u32 %v862, 7
    %v864 = vsub.s32 0, %v863
    %v865 = vrot.slane %v860, %v864
    %v867 = vadd.f32 %v854, %v865
    %v868 = vadd.f32 %v857, %v865
    %v869 = vmax.f32 %v867, 0.0
    %v870 = vmax.f32 %v868, 0.0
    %v871 = vpack.c.bf16 %v870, %v869
    %v872 = vld [vmem:[#allocation13] sm:$0xf]
    %v873 = vld [vmem:[#allocation13 + $0x4] sm:$0xf]
    %v874 = vld [vmem:[#allocation13 + $0x8] sm:$0xf]
    %v875 = vld [vmem:[#allocation13 + $0xc] sm:$0xf]
    %v876 = vld [vmem:[#allocation13 + $0x10] sm:$0xf]
    %v877 = vld [vmem:[#allocation13 + $0x14] sm:$0xf]
    %v878 = vld [vmem:[#allocation13 + $0x18] sm:$0xf]
    %v879 = vld [vmem:[#allocation13 + $0x1c] sm:$0xf]
    %v880 = vld [vmem:[#allocation13 + $0x20] sm:$0xf]
    %v881 = vld [vmem:[#allocation13 + $0x24] sm:$0xf]
    %v882 = vld [vmem:[#allocation13 + $0x28] sm:$0xf]
    %v883 = vld [vmem:[#allocation13 + $0x2c] sm:$0xf]
    %v884 = vld [vmem:[#allocation13 + $0x30] sm:$0xf]
    %v885 = vld [vmem:[#allocation13 + $0x34] sm:$0xf]
    %v886 = vld [vmem:[#allocation13 + $0x38] sm:$0xf]
    %v887 = vld [vmem:[#allocation13 + $0x3c] sm:$0xf]
    %v888 = vld [vmem:[%s10] sm:$0x1]
    %v890 = vlaneseq
    %v891 = vshrl.u32 %v890, 7
    %v892 = vsub.s32 0, %v891
    %v893 = vrot.slane %v888, %v892
    %v911 = vunpack.c.l.b16 %v872
    %v912 = vunpack.c.l.b16 %v873
    %v913 = vunpack.c.l.b16 %v874
    %v914 = vunpack.c.l.b16 %v875
    %v915 = vunpack.c.l.b16 %v876
    %v916 = vunpack.c.l.b16 %v877
    %v917 = vunpack.c.l.b16 %v878
    %v918 = vunpack.c.l.b16 %v879
    %v919 = vunpack.c.l.b16 %v880
    %v920 = vunpack.c.l.b16 %v881
    %v921 = vunpack.c.l.b16 %v882
    %v922 = vunpack.c.l.b16 %v883
    %v923 = vunpack.c.l.b16 %v884
    %v924 = vunpack.c.l.b16 %v885
    %v925 = vunpack.c.l.b16 %v886
    %v926 = vunpack.c.l.b16 %v887
    %v927 = vpack.c.b16 %v912, %v911
    %v928 = vpack.c.b16 %v914, %v913
    %v929 = vpack.c.b16 %v916, %v915
    %v930 = vpack.c.b16 %v918, %v917
    %v931 = vpack.c.b16 %v920, %v919
    %v932 = vpack.c.b16 %v922, %v921
    %v933 = vpack.c.b16 %v924, %v923
    %v934 = vpack.c.b16 %v926, %v925
    %943 = vmatprep.subr.bf16.mxu0 0
    %944 = vmatpush1.bf16.msra.mxu0 %v927
    %945 = vmatprep.subr.bf16.mxu0 0
    %946 = vmatpush1.bf16.msra.mxu0 %v928
    %947 = vmatprep.subr.bf16.mxu0 0
    %948 = vmatpush1.bf16.msra.mxu0 %v929
    %949 = vmatprep.subr.bf16.mxu0 0
    %950 = vmatpush1.bf16.msra.mxu0 %v930
    %951 = vmatprep.subr.bf16.mxu0 0
    %952 = vmatpush1.bf16.msra.mxu0 %v931
    %953 = vmatprep.subr.bf16.mxu0 0
    %954 = vmatpush1.bf16.msra.mxu0 %v932
    %955 = vmatprep.subr.bf16.mxu0 0
    %956 = vmatpush1.bf16.msra.mxu0 %v933
    %957 = vmatprep.subr.bf16.mxu0 0
    %958 = vmatpush1.bf16.msra.mxu0 %v934
    %959 = vmatprep.subr.bf16.mxu0 0
    %960 = vmatpush1.bf16.msra.mxu0 0
    %961 = vmatprep.subr.bf16.mxu0 0
    %962 = vmatpush1.bf16.msra.mxu0 0
    %963 = vmatprep.subr.bf16.mxu0 0
    %964 = vmatpush1.bf16.msra.mxu0 0
    %965 = vmatprep.subr.bf16.mxu0 0
    %966 = vmatpush1.bf16.msra.mxu0 0
    %967 = vmatprep.subr.bf16.mxu0 0
    %968 = vmatpush1.bf16.msra.mxu0 0
    %969 = vmatprep.subr.bf16.mxu0 0
    %970 = vmatpush1.bf16.msra.mxu0 0
    %971 = vmatprep.subr.bf16.mxu0 0
    %972 = vmatpush1.bf16.msra.mxu0 0
    %973 = vmatprep.subr.bf16.mxu0 0
    %974 = vmatpush1.bf16.msra.mxu0 0
    %975 = vmatprep.mubr.bf16.mxu0 0
    %976 = vmatmul.mubr.bf16.gmra.mrb[0].mxu0 %v871
    %v977 = vpop.f32.mrb[0].mxu0
    %v978 = vadd.f32 %v893, %v977
    %v979 = vpop.f32.mrb[0].mxu0
    %v980 = vpop.f32.mrb[0].mxu0
    %v981 = vadd.f32 %v893, %v980
    %v982 = vpop.f32.mrb[0].mxu0
    %983 = vdwg.mxu0
    %v984 = vmax.f32 %v978, 0.0
    %v985 = vmax.f32 %v981, 0.0
    %v986 = vpack.c.bf16 %v985, %v984
    %v987 = vld [vmem:[#allocation14] sm:$0xf]
    %v988 = vld [vmem:[#allocation14 + $0x4] sm:$0xf]
    %v989 = vld [vmem:[#allocation14 + $0x8] sm:$0xf]
    %v990 = vld [vmem:[#allocation14 + $0xc] sm:$0xf]
    %v991 = vld [vmem:[#allocation14 + $0x10] sm:$0xf]
    %v992 = vld [vmem:[#allocation14 + $0x14] sm:$0xf]
    %v993 = vld [vmem:[#allocation14 + $0x18] sm:$0xf]
    %v994 = vld [vmem:[#allocation14 + $0x1c] sm:$0xf]
    %v995 = vld [vmem:[#allocation14 + $0x20] sm:$0xf]
    %v996 = vld [vmem:[#allocation14 + $0x24] sm:$0xf]
    %v997 = vld [vmem:[#allocation14 + $0x28] sm:$0xf]
    %v998 = vld [vmem:[#allocation14 + $0x2c] sm:$0xf]
    %v999 = vld [vmem:[#allocation14 + $0x30] sm:$0xf]
    %v1000 = vld [vmem:[#allocation14 + $0x34] sm:$0xf]
    %v1001 = vld [vmem:[#allocation14 + $0x38] sm:$0xf]
    %v1002 = vld [vmem:[#allocation14 + $0x3c] sm:$0xf]
    %v1003 = vld [vmem:[%s12] sm:$0x1]
    %v1005 = vlaneseq
    %v1006 = vshrl.u32 %v1005, 7
    %v1007 = vsub.s32 0, %v1006
    %v1008 = vrot.slane %v1003, %v1007
    %v1026 = vunpack.c.l.b16 %v987
    %v1027 = vunpack.c.l.b16 %v988
    %v1028 = vunpack.c.l.b16 %v989
    %v1029 = vunpack.c.l.b16 %v990
    %v1030 = vunpack.c.l.b16 %v991
    %v1031 = vunpack.c.l.b16 %v992
    %v1032 = vunpack.c.l.b16 %v993
    %v1033 = vunpack.c.l.b16 %v994
    %v1034 = vunpack.c.l.b16 %v995
    %v1035 = vunpack.c.l.b16 %v996
    %v1036 = vunpack.c.l.b16 %v997
    %v1037 = vunpack.c.l.b16 %v998
    %v1038 = vunpack.c.l.b16 %v999
    %v1039 = vunpack.c.l.b16 %v1000
    %v1040 = vunpack.c.l.b16 %v1001
    %v1041 = vunpack.c.l.b16 %v1002
    %v1042 = vpack.c.b16 %v1027, %v1026
    %v1043 = vpack.c.b16 %v1029, %v1028
    %v1044 = vpack.c.b16 %v1031, %v1030
    %v1045 = vpack.c.b16 %v1033, %v1032
    %v1046 = vpack.c.b16 %v1035, %v1034
    %v1047 = vpack.c.b16 %v1037, %v1036
    %v1048 = vpack.c.b16 %v1039, %v1038
    %v1049 = vpack.c.b16 %v1041, %v1040
    %1058 = vmatprep.subr.bf16.mxu0 0
    %1059 = vmatpush1.bf16.msra.mxu0 %v1042
    %1060 = vmatprep.subr.bf16.mxu0 0
    %1061 = vmatpush1.bf16.msra.mxu0 %v1043
    %1062 = vmatprep.subr.bf16.mxu0 0
    %1063 = vmatpush1.bf16.msra.mxu0 %v1044
    %1064 = vmatprep.subr.bf16.mxu0 0
    %1065 = vmatpush1.bf16.msra.mxu0 %v1045
    %1066 = vmatprep.subr.bf16.mxu0 0
    %1067 = vmatpush1.bf16.msra.mxu0 %v1046
    %1068 = vmatprep.subr.bf16.mxu0 0
    %1069 = vmatpush1.bf16.msra.mxu0 %v1047
    %1070 = vmatprep.subr.bf16.mxu0 0
    %1071 = vmatpush1.bf16.msra.mxu0 %v1048
    %1072 = vmatprep.subr.bf16.mxu0 0
    %1073 = vmatpush1.bf16.msra.mxu0 %v1049
    %1074 = vmatprep.subr.bf16.mxu0 0
    %1075 = vmatpush1.bf16.msra.mxu0 0
    %1076 = vmatprep.subr.bf16.mxu0 0
    %1077 = vmatpush1.bf16.msra.mxu0 0
    %1078 = vmatprep.subr.bf16.mxu0 0
    %1079 = vmatpush1.bf16.msra.mxu0 0
    %1080 = vmatprep.subr.bf16.mxu0 0
    %1081 = vmatpush1.bf16.msra.mxu0 0
    %1082 = vmatprep.subr.bf16.mxu0 0
    %1083 = vmatpush1.bf16.msra.mxu0 0
    %1084 = vmatprep.subr.bf16.mxu0 0
    %1085 = vmatpush1.bf16.msra.mxu0 0
    %1086 = vmatprep.subr.bf16.mxu0 0
    %1087 = vmatpush1.bf16.msra.mxu0 0
    %1088 = vmatprep.subr.bf16.mxu0 0
    %1089 = vmatpush1.bf16.msra.mxu0 0
    %1090 = vmatprep.mubr.bf16.mxu0 0
    %1091 = vmatmul.mubr.bf16.gmra.mrb[0].mxu0 %v986
    %v1092 = vpop.f32.mrb[0].mxu0
    %v1093 = vadd.f32 %v1008, %v1092
    %v1094 = vpop.f32.mrb[0].mxu0
    %v1095 = vpop.f32.mrb[0].mxu0
    %v1096 = vadd.f32 %v1008, %v1095
    %v1097 = vpop.f32.mrb[0].mxu0
    %1098 = vdwg.mxu0
    %1099 = vst [vmem:[#allocation16] sm:$0xff] %v1093
    %1100 = vst [vmem:[#allocation16 + $0x8] sm:$0xff] %v1096
    // Predicated region
    $region86: #{tpu_custom_call.1} parent=1 // pred_check
      _
    $region87: #{tpu_custom_call.1} parent=1 // pred_check_branch
      %1102 = sbr.rel (0) target = $region89
    $region88: #{tpu_custom_call.1} parent=1 // pred_region
      %s1104 = ssub.s32 256, 256
      %1105 = vsyncadd [#allocation4], %s1104
      %s1106 = sshll.u32 [#allocation16], 4
      %s1107 = int_to_ptr.vmem [resolvable:$true] %s1106
      %1112 = dma.vmem_to_hbm [thread:$0]  %s1107, 256, %s13, [#allocation4], 128, 128, 8
    $region89: #{tpu_custom_call.1} parent=1 // pred_fallthru
      _
    // Predicated region
    $region90: #{tpu_custom_call.1} parent=1 // pred_check
      _
    $region91: #{tpu_custom_call.1} parent=1 // pred_check_branch
      %1114 = sbr.rel (0) target = $region93
    $region92: #{tpu_custom_call.1} parent=1 // pred_region
      %1115 = dma.done [#allocation4], 256
    $region93: #{tpu_custom_call.1} parent=1 // pred_fallthru
      _
    %1116 = vsyncpa [#allocation3], 1
    %1117 = vsyncpa [#allocation6], 1
    %1118 = vsyncpa [#allocation9], 1
    %1119 = vsyncpa [#allocation12], 1
    %1120 = vsyncpa [#allocation15], 1
    %1121 = vsyncpa [#allocation4], 1

</llo_original>
